<compile_context>
chip_gen: v7x
topology: tpu7x:2x2x1
jax: 0.10.0
libtpu: 0.0.40
codegen_flags: <defaults>
</compile_context>

<pallas_src>
import math

import jax
import jax.numpy as jnp
import numpy as np
from jax.experimental import pallas as pl
from jax.experimental.pallas import tpu as pltpu

# ----------------------------------------------------------------------------
# Hyper-parameters (small, consistent with SimpleTransformer.__init__)
# ----------------------------------------------------------------------------
VOCAB = 64
D_MODEL = 32
NHEAD = 4
NUM_LAYERS = 2
DIM_FF = 64
BATCH = 2
SEQ = 8
HEAD_DIM = D_MODEL // NHEAD
EPS = 1e-5                      # PyTorch layer_norm_eps default
T_TOKENS = BATCH * SEQ          # 16
V_PAD = 128                     # lane-dense logits (VOCAB=64 padded to 128)
HT = NHEAD * T_TOKENS           # 64 dense-score lanes

# slab geometry -----------------------------------------------------------------
SLAB_W = 2 * D_MODEL + NHEAD * D_MODEL          # 192: [Wq | Wk | Wvo_0..3]
RB_BIAS = D_MODEL + DIM_FF + D_MODEL            # 128: bias rows start
L_ROWS = RB_BIAS + 8                            # 136 rows per layer slab

R_EMB = 0
R_EMBW0 = VOCAB                                 # 64
R_FCW = 2 * VOCAB                               # 128
R_BDM = R_FCW + D_MODEL                         # 160
R_AB = R_BDM + D_MODEL                          # 192
R_ONES = R_AB + T_TOKENS                        # 208
R_FCB = R_ONES + HT                             # 272
C_ROWS = R_FCB + 8                              # 280


# ----------------------------------------------------------------------------
# Fused kernel
# ----------------------------------------------------------------------------
def _layernorm(x, gamma, beta):
    # Concurrent sum / sum-of-squares (independent XLU reduces).  The
    # E[x^2]-E[x]^2 form can cancel for huge activations; post-LN magnitudes
    # here are O(1) and var is clamped, so this is safe at 1e-2 tolerance.
    inv_n = 1.0 / x.shape[-1]
    s1 = jnp.sum(x, axis=-1, keepdims=True)
    s2 = jnp.sum(x * x, axis=-1, keepdims=True)
    mu = s1 * inv_n
    var = jnp.maximum(s2 * inv_n - mu * mu, 0.0)
    return (x - mu) * jax.lax.rsqrt(var + EPS) * gamma + beta


def fused_forward_kernel(ids_ref, layers_ref, const_ref, o_ref):
    T = T_TOKENS
    D = D_MODEL

    # ---- packed constants (static ref slices -> small VMEM loads) ----------
    emb = const_ref[R_EMB:R_EMB + VOCAB, 0:D]                 # (V, D)
    embW0 = const_ref[R_EMBW0:R_EMBW0 + VOCAB, :]             # (V, 192)
    fcw = const_ref[R_FCW:R_FCW + D, 0:V_PAD]                 # (D, 128)
    bd_mask = const_ref[R_BDM:R_BDM + D, 0:HT]                # (D, 64)
    attn_b = const_ref[R_AB:R_AB + T, 0:HT]                   # (T, 64)
    ones_c = const_ref[R_ONES:R_ONES + HT, 0:NHEAD]           # (64, 4)
    fcb = const_ref[R_FCB:R_FCB + 1, 0:V_PAD]                 # (1, 128)

    # ---- embedding: one-hot @ table (MXU-friendly gather) ------------------
    onehot = (jax.lax.broadcasted_iota(jnp.int32, (T, VOCAB), 1)
              == ids_ref[...]).astype(jnp.float32)            # (T, V)
    x = jnp.dot(onehot, emb, preferred_element_type=jnp.float32)   # (T, D)

    # ---- encoder layers (post-LN, dropout = identity), static unroll -------
    for l in range(NUM_LAYERS):
        biases = layers_ref[l, RB_BIAS:RB_BIAS + 8, :]        # (8, 192)
        b_big = biases[0:1, :]                # [bq*scale | bk | 0...]
        bo = biases[1:2, 0:D]                 # bo + bv@wo (folded)
        g1 = biases[2:3, 0:D]
        be1 = biases[3:4, 0:D]
        b1 = biases[4:5, 0:DIM_FF]
        b2 = biases[5:6, 0:D]
        g2 = biases[6:7, 0:D]
        be2 = biases[7:8, 0:D]

        if l == 0:
            # layer-0 prefold: emb@W_big folded at pack time -> this matmul
            # depends only on `onehot`, pipelining with x = onehot@emb.
            qkv = jnp.dot(onehot, embW0,
                          preferred_element_type=jnp.float32) + b_big
        else:
            w_big = layers_ref[l, 0:D, :]                     # (D, 192)
            qkv = jnp.dot(x, w_big,
                          preferred_element_type=jnp.float32) + b_big

        q = qkv[:, 0:D]                       # 1/sqrt(hd) folded into Wq/bq
        k = qkv[:, D:2 * D]
        vcat = qkv[:, 2 * D:2 * D + NHEAD * D]   # [V'_0 | .. | V'_3], wo folded

        # lane-dense scores: one block-diagonal K matmul -> (T, nhead*T)
        kT_bd = jnp.concatenate([k.T] * NHEAD, axis=1) * bd_mask   # (D, 64)
        s = jnp.dot(q, kT_bd, preferred_element_type=jnp.float32) + attn_b

        # Row-global max: mathematically identical per head-block; score ranges
        # here are O(10) so no head can underflow to denom==0 (clamped anyway).
        m = jnp.max(s, axis=-1, keepdims=True)
        p = jnp.exp(s - m)                                          # (T, 64)
        denom = jnp.dot(p, ones_c, preferred_element_type=jnp.float32)  # (T,4)
        r = pl.reciprocal(jnp.maximum(denom, 1e-30), approx=True)       # (T,4)

        # per-head PV' matmuls, reduced with cheap VPU adds (no concatenate,
        # no ctx@wo matmul; bias already folded into bo).
        proj = bo
        for h in range(NHEAD):
            ctx_h = jnp.dot(p[:, h * T:(h + 1) * T],
                            vcat[:, h * D:(h + 1) * D],
                            preferred_element_type=jnp.float32)     # (T, D)
            proj = proj + ctx_h * r[:, h:h + 1]

        # residual + LayerNorm 1
        x1 = _layernorm(x + proj, g1, be1)

        # feed-forward: Linear -> ReLU -> Linear
        w1 = layers_ref[l, D + DIM_FF:RB_BIAS, 0:DIM_FF]      # (D, FF)
        w2 = layers_ref[l, D:D + DIM_FF, 0:D]                 # (FF, D)
        h1 = jnp.maximum(
            jnp.dot(x1, w1, preferred_element_type=jnp.float32) + b1, 0.0)
        y = jnp.dot(h1, w2, preferred_element_type=jnp.float32) + b2

        # residual + LayerNorm 2
        x = _layernorm(x1 + y, g2, be2)

    # ---- final vocab projection (lane-dense, padded to 128) ----------------
    o_ref[...] = jnp.dot(x, fcw, preferred_element_type=jnp.float32) + fcb


# ----------------------------------------------------------------------------
# Host wrapper: ONE pallas_call for the whole forward, 3 input slabs
# ----------------------------------------------------------------------------
@jax.jit
def forward(packed, tokens):
    ids2d = tokens.reshape(T_TOKENS, 1).astype(jnp.int32)
    logits_pad = pl.pallas_call(
        fused_forward_kernel,
        out_shape=jax.ShapeDtypeStruct((T_TOKENS, V_PAD), jnp.float32),
        in_specs=[pl.BlockSpec(memory_space=pltpu.MemorySpace.VMEM)] * 3,
        out_specs=pl.BlockSpec(memory_space=pltpu.MemorySpace.VMEM),
    )(ids2d, packed["layers"], packed["const"])
    return logits_pad[:, :VOCAB].reshape(BATCH, SEQ, VOCAB)


# ----------------------------------------------------------------------------
# Parameter packing (host-side, numpy/f64 folds for accuracy)
# ----------------------------------------------------------------------------
def pack_params(params):
    D, FF, hd = D_MODEL, DIM_FF, HEAD_DIM
    scale = 1.0 / math.sqrt(hd)

    def f64(a):
        return np.asarray(a, dtype=np.float64)

    layer_slabs = []
    w_big0 = None
    for li, p in enumerate(params["layers"]):
        wqkv, bqkv = f64(p["wqkv"]), f64(p["bqkv"])
        wo, bo = f64(p["wo"]), f64(p["bo"])
        wq, bq = wqkv[:, :D] * scale, bqkv[:, :D] * scale
        wk, bk = wqkv[:, D:2 * D], bqkv[:, D:2 * D]
        wv, bv = wqkv[:, 2 * D:3 * D], bqkv[:, 2 * D:3 * D]

        # fold wo into per-head V columns; fold bv@wo into bo'
        wvo = np.concatenate(
            [wv[:, h * hd:(h + 1) * hd] @ wo[h * hd:(h + 1) * hd, :]
             for h in range(NHEAD)], axis=1)                  # (D, NHEAD*D)
        w_big = np.concatenate([wq, wk, wvo], axis=1)          # (D, 192)
        bo_p = bo + bv @ wo                                    # (1, D)
        b_big = np.concatenate([bq, bk, np.zeros((1, NHEAD * D))], axis=1)

        slab = np.zeros((L_ROWS, SLAB_W), np.float64)
        slab[0:D, :] = w_big
        slab[D:D + FF, 0:D] = f64(p["w2"])
        slab[D + FF:RB_BIAS, 0:FF] = f64(p["w1"])
        slab[RB_BIAS + 0, :] = b_big[0]
        slab[RB_BIAS + 1, 0:D] = bo_p[0]
        slab[RB_BIAS + 2, 0:D] = f64(p["g1"])[0]
        slab[RB_BIAS + 3, 0:D] = f64(p["be1"])[0]
        slab[RB_BIAS + 4, 0:FF] = f64(p["b1"])[0]
        slab[RB_BIAS + 5, 0:D] = f64(p["b2"])[0]
        slab[RB_BIAS + 6, 0:D] = f64(p["g2"])[0]
        slab[RB_BIAS + 7, 0:D] = f64(p["be2"])[0]
        layer_slabs.append(slab)
        if li == 0:
            w_big0 = w_big

    emb = f64(params["emb"])
    const = np.zeros((C_ROWS, SLAB_W), np.float64)
    const[R_EMB:R_EMB + VOCAB, 0:D] = emb
    const[R_EMBW0:R_EMBW0 + VOCAB, :] = emb @ w_big0          # layer-0 prefold
    const[R_FCW:R_FCW + D, 0:VOCAB] = f64(params["fc_w"])
    const[R_FCB, 0:VOCAB] = f64(params["fc_b"])[0]

    # block-diagonal mask for the dense score matmul
    d_idx = np.arange(D)[:, None]
    c_idx = np.arange(HT)[None, :]
    const[R_BDM:R_BDM + D, 0:HT] = (
        (c_idx // T_TOKENS) == (d_idx // hd)).astype(np.float64)

    # additive attention mask (token i attends j iff s_i == s_j), tiled per head
    i_idx = np.arange(T_TOKENS)[:, None]
    j_idx = np.arange(T_TOKENS)[None, :]
    blk = np.where((i_idx % SEQ) == (j_idx % SEQ), 0.0, -1e30)
    const[R_AB:R_AB + T_TOKENS, 0:HT] = np.tile(blk, (1, NHEAD))

    # block-ones matrix for per-head softmax denominators
    rr = np.arange(HT)[:, None]
    hh = np.arange(NHEAD)[None, :]
    const[R_ONES:R_ONES + HT, 0:NHEAD] = ((rr // T_TOKENS) == hh).astype(np.float64)

    return {
        "layers": jnp.asarray(np.stack(layer_slabs), jnp.float32),  # (L,136,192)
        "const": jnp.asarray(const, jnp.float32),                   # (280,192)
    }


# ----------------------------------------------------------------------------
# Deterministic parameter init (synthetic; not a checkpoint load)
# ----------------------------------------------------------------------------
def init_params(key):
    def nrm(k, shape, scale):
        return jax.random.normal(k, shape, jnp.float32) * scale

    ks = jax.random.split(key, 3 + NUM_LAYERS)
    params = {
        "emb": nrm(ks[0], (VOCAB, D_MODEL), 1.0),
        "fc_w": nrm(ks[1], (D_MODEL, VOCAB), 1.0 / math.sqrt(D_MODEL)),
        "fc_b": nrm(ks[2], (1, VOCAB), 0.02),
        "layers": [],
    }
    for l in range(NUM_LAYERS):
        kk = jax.random.split(ks[3 + l], 8)
        params["layers"].append(
            {
                "wqkv": nrm(kk[0], (D_MODEL, 3 * D_MODEL), 1.0 / math.sqrt(D_MODEL)),
                "bqkv": nrm(kk[1], (1, 3 * D_MODEL), 0.02),
                "wo": nrm(kk[2], (D_MODEL, D_MODEL), 1.0 / math.sqrt(D_MODEL)),
                "bo": nrm(kk[3], (1, D_MODEL), 0.02),
                "g1": jnp.ones((1, D_MODEL), jnp.float32),
                "be1": jnp.zeros((1, D_MODEL), jnp.float32),
                "w1": nrm(kk[4], (D_MODEL, DIM_FF), 1.0 / math.sqrt(D_MODEL)),
                "b1": nrm(kk[5], (1, DIM_FF), 0.02),
                "w2": nrm(kk[6], (DIM_FF, D_MODEL), 1.0 / math.sqrt(DIM_FF)),
                "b2": nrm(kk[7], (1, D_MODEL), 0.02),
                "g2": jnp.ones((1, D_MODEL), jnp.float32),
                "be2": jnp.zeros((1, D_MODEL), jnp.float32),
            }
        )
    return params


# ----------------------------------------------------------------------------
# Pure-JAX reference (mirrors PyTorch semantics incl. batch_first=False quirk)
# ----------------------------------------------------------------------------
def _ln_ref(x, g, b):
    mu = jnp.mean(x, axis=-1, keepdims=True)
    var = jnp.mean((x - mu) ** 2, axis=-1, keepdims=True)
    return (x - mu) * jax.lax.rsqrt(var + EPS) * g + b


def reference_forward(params, tokens):
    x = jnp.take(params["emb"], tokens, axis=0)      # (B, S, D)
    for p in params["layers"]:
        qkv = jnp.einsum("bsd,de->bse", x, p["wqkv"]) + p["bqkv"][0]
        q, k, v = jnp.split(qkv, 3, axis=-1)
        q = q.reshape(BATCH, SEQ, NHEAD, HEAD_DIM)
        k = k.reshape(BATCH, SEQ, NHEAD, HEAD_DIM)
        v = v.reshape(BATCH, SEQ, NHEAD, HEAD_DIM)
        scores = jnp.einsum("ishd,jshd->shij", q, k) / math.sqrt(HEAD_DIM)
        probs = jax.nn.softmax(scores, axis=-1)       # attention over axis 0 (=B)
        ctx = jnp.einsum("shij,jshd->ishd", probs, v).reshape(BATCH, SEQ, D_MODEL)
        attn = jnp.einsum("bsd,de->bse", ctx, p["wo"]) + p["bo"][0]
        x = _ln_ref(x + attn, p["g1"][0], p["be1"][0])
        h = jax.nn.relu(jnp.einsum("bsd,df->bsf", x, p["w1"]) + p["b1"][0])
        y = jnp.einsum("bsf,fd->bsd", h, p["w2"]) + p["b2"][0]
        x = _ln_ref(x + y, p["g2"][0], p["be2"][0])
    return jnp.einsum("bsd,dv->bsv", x, params["fc_w"]) + params["fc_b"][0]


# TODO(synk): dropout (p=0.1) inside TransformerEncoderLayer is identity in
# eval/inference mode and is omitted; generate()'s sampling loop is host-side
# control flow and is out of kernel scope.

if __name__ == "__main__":
    key = jax.random.PRNGKey(0)
    pkey, tkey = jax.random.split(key)
    params = init_params(pkey)
    packed = pack_params(params)
    tokens = jax.random.randint(tkey, (BATCH, SEQ), 0, VOCAB, dtype=jnp.int32)

    out = forward(packed, tokens)
    out = jax.block_until_ready(out)
    assert out.shape == (BATCH, SEQ, VOCAB)
    assert bool(jnp.all(jnp.isfinite(out)))

    ref = reference_forward(params, tokens)
    np.testing.assert_allclose(np.asarray(out), np.asarray(ref), rtol=1e-2, atol=1e-2)

    print("KERNEL_OK")
</pallas_src>

<mosaic_0001>
module attributes {stable_mosaic.version = 11 : i64} {
  func.func @fused_forward_kernel(%arg0: memref<16x1xi32, #tpu.memory_space<vmem>>, %arg1: memref<2x136x192xf32, #tpu.memory_space<vmem>>, %arg2: memref<280x192xf32, #tpu.memory_space<vmem>>, %arg3: memref<16x128xf32, #tpu.memory_space<vmem>>) attributes {dimension_semantics = [], scalar_prefetch = 0 : i64, scratch_operands = 0 : i64, tpu.core_type = #tpu.core_type<tc>} {
    %c0 = arith.constant 0 : index
    %c0_0 = arith.constant 0 : index
    %0 = vector.load %arg2[%c0, %c0_0] : memref<280x192xf32, #tpu.memory_space<vmem>>, vector<64x32xf32>
    %c64 = arith.constant 64 : index
    %c0_1 = arith.constant 0 : index
    %1 = vector.load %arg2[%c64, %c0_1] : memref<280x192xf32, #tpu.memory_space<vmem>>, vector<64x192xf32>
    %c128 = arith.constant 128 : index
    %c0_2 = arith.constant 0 : index
    %2 = vector.load %arg2[%c128, %c0_2] : memref<280x192xf32, #tpu.memory_space<vmem>>, vector<32x128xf32>
    %c160 = arith.constant 160 : index
    %c0_3 = arith.constant 0 : index
    %3 = vector.load %arg2[%c160, %c0_3] : memref<280x192xf32, #tpu.memory_space<vmem>>, vector<32x64xf32>
    %c192 = arith.constant 192 : index
    %c0_4 = arith.constant 0 : index
    %4 = vector.load %arg2[%c192, %c0_4] : memref<280x192xf32, #tpu.memory_space<vmem>>, vector<16x64xf32>
    %c208 = arith.constant 208 : index
    %c0_5 = arith.constant 0 : index
    %5 = vector.load %arg2[%c208, %c0_5] : memref<280x192xf32, #tpu.memory_space<vmem>>, vector<64x4xf32>
    %c272 = arith.constant 272 : index
    %c0_6 = arith.constant 0 : index
    %6 = vector.load %arg2[%c272, %c0_6] : memref<280x192xf32, #tpu.memory_space<vmem>>, vector<1x128xf32>
    %7 = tpu.iota {dimensions = array<i32: 1>} : vector<16x64xi32>
    %c0_7 = arith.constant 0 : index
    %c0_8 = arith.constant 0 : index
    %8 = vector.load %arg0[%c0_7, %c0_8] : memref<16x1xi32, #tpu.memory_space<vmem>>, vector<16x1xi32>
    %9 = vector.broadcast %8 : vector<16x1xi32> to vector<16x64xi32>
    %10 = arith.cmpi eq, %7, %9 : vector<16x64xi32>
    %11 = arith.extui %10 : vector<16x64xi1> to vector<16x64xi32>
    %12 = arith.sitofp %11 : vector<16x64xi32> to vector<16x64xf32>
    %cst = arith.constant dense<0.000000e+00> : vector<16x32xf32>
    %13 = tpu.matmul %12, %0, %cst {dimension_numbers = #tpu.dot_dimension_numbers<[1], [0], [0], [1], [0, 0, 1, 1], [], []>} : vector<16x64xf32>, vector<64x32xf32>, vector<16x32xf32> -> vector<16x32xf32>
    %c0_9 = arith.constant 0 : index
    %c128_10 = arith.constant 128 : index
    %c0_11 = arith.constant 0 : index
    %14 = vector.load %arg1[%c0_9, %c128_10, %c0_11] : memref<2x136x192xf32, #tpu.memory_space<vmem>>, vector<1x8x192xf32>
    %15 = vector.shape_cast %14 : vector<1x8x192xf32> to vector<8x192xf32>
    %16 = vector.extract_strided_slice %15 {offsets = [0, 0], sizes = [1, 192], strides = [1, 1]} : vector<8x192xf32> to vector<1x192xf32>
    %17 = vector.extract_strided_slice %15 {offsets = [1, 0], sizes = [1, 32], strides = [1, 1]} : vector<8x192xf32> to vector<1x32xf32>
    %18 = vector.extract_strided_slice %15 {offsets = [2, 0], sizes = [1, 32], strides = [1, 1]} : vector<8x192xf32> to vector<1x32xf32>
    %19 = vector.extract_strided_slice %15 {offsets = [3, 0], sizes = [1, 32], strides = [1, 1]} : vector<8x192xf32> to vector<1x32xf32>
    %20 = vector.extract_strided_slice %15 {offsets = [4, 0], sizes = [1, 64], strides = [1, 1]} : vector<8x192xf32> to vector<1x64xf32>
    %21 = vector.extract_strided_slice %15 {offsets = [5, 0], sizes = [1, 32], strides = [1, 1]} : vector<8x192xf32> to vector<1x32xf32>
    %22 = vector.extract_strided_slice %15 {offsets = [6, 0], sizes = [1, 32], strides = [1, 1]} : vector<8x192xf32> to vector<1x32xf32>
    %23 = vector.extract_strided_slice %15 {offsets = [7, 0], sizes = [1, 32], strides = [1, 1]} : vector<8x192xf32> to vector<1x32xf32>
    %cst_12 = arith.constant dense<0.000000e+00> : vector<16x192xf32>
    %24 = tpu.matmul %12, %1, %cst_12 {dimension_numbers = #tpu.dot_dimension_numbers<[1], [0], [0], [1], [0, 0, 1, 1], [], []>} : vector<16x64xf32>, vector<64x192xf32>, vector<16x192xf32> -> vector<16x192xf32>
    %25 = vector.broadcast %16 : vector<1x192xf32> to vector<16x192xf32>
    %26 = arith.addf %24, %25 : vector<16x192xf32>
    %27 = vector.extract_strided_slice %26 {offsets = [0, 0], sizes = [16, 32], strides = [1, 1]} : vector<16x192xf32> to vector<16x32xf32>
    %28 = vector.extract_strided_slice %26 {offsets = [0, 32], sizes = [16, 32], strides = [1, 1]} : vector<16x192xf32> to vector<16x32xf32>
    %29 = vector.extract_strided_slice %26 {offsets = [0, 64], sizes = [16, 128], strides = [1, 1]} : vector<16x192xf32> to vector<16x128xf32>
    %30 = tpu.transpose %28, [1, 0] : vector<16x32xf32> -> vector<32x16xf32>
    %31 = tpu.concatenate %30, %30, %30, %30 in 1 : vector<32x16xf32>, vector<32x16xf32>, vector<32x16xf32>, vector<32x16xf32> -> vector<32x64xf32>
    %32 = arith.mulf %31, %3 : vector<32x64xf32>
    %cst_13 = arith.constant dense<0.000000e+00> : vector<16x64xf32>
    %33 = tpu.matmul %27, %32, %cst_13 {dimension_numbers = #tpu.dot_dimension_numbers<[1], [0], [0], [1], [0, 0, 1, 1], [], []>} : vector<16x32xf32>, vector<32x64xf32>, vector<16x64xf32> -> vector<16x64xf32>
    %34 = arith.addf %33, %4 : vector<16x64xf32>
    %cst_14 = arith.constant dense<0xFF800000> : vector<16xf32>
    %35 = vector.multi_reduction <maximumf>, %34, %cst_14 [1] : vector<16x64xf32> to vector<16xf32>
    %36 = vector.shape_cast %35 : vector<16xf32> to vector<16x1xf32>
    %37 = vector.broadcast %36 : vector<16x1xf32> to vector<16x64xf32>
    %38 = arith.subf %34, %37 : vector<16x64xf32>
    %39 = math.exp %38 : vector<16x64xf32>
    %cst_15 = arith.constant dense<0.000000e+00> : vector<16x4xf32>
    %40 = tpu.matmul %39, %5, %cst_15 {dimension_numbers = #tpu.dot_dimension_numbers<[1], [0], [0], [1], [0, 0, 1, 1], [], []>} : vector<16x64xf32>, vector<64x4xf32>, vector<16x4xf32> -> vector<16x4xf32>
    %cst_16 = arith.constant 1.000000e-30 : f32
    %41 = vector.broadcast %cst_16 : f32 to vector<16x4xf32>
    %42 = arith.maximumf %40, %41 : vector<16x4xf32>
    %43 = tpu.reciprocal %42 {approx = true} : vector<16x4xf32> -> vector<16x4xf32>
    %44 = vector.extract_strided_slice %39 {offsets = [0, 0], sizes = [16, 16], strides = [1, 1]} : vector<16x64xf32> to vector<16x16xf32>
    %45 = vector.extract_strided_slice %29 {offsets = [0, 0], sizes = [16, 32], strides = [1, 1]} : vector<16x128xf32> to vector<16x32xf32>
    %cst_17 = arith.constant dense<0.000000e+00> : vector<16x32xf32>
    %46 = tpu.matmul %44, %45, %cst_17 {dimension_numbers = #tpu.dot_dimension_numbers<[1], [0], [0], [1], [0, 0, 1, 1], [], []>} : vector<16x16xf32>, vector<16x32xf32>, vector<16x32xf32> -> vector<16x32xf32>
    %47 = vector.extract_strided_slice %43 {offsets = [0, 0], sizes = [16, 1], strides = [1, 1]} : vector<16x4xf32> to vector<16x1xf32>
    %48 = vector.broadcast %47 : vector<16x1xf32> to vector<16x32xf32>
    %49 = arith.mulf %46, %48 : vector<16x32xf32>
    %50 = vector.broadcast %17 : vector<1x32xf32> to vector<16x32xf32>
    %51 = arith.addf %50, %49 : vector<16x32xf32>
    %52 = vector.extract_strided_slice %39 {offsets = [0, 16], sizes = [16, 16], strides = [1, 1]} : vector<16x64xf32> to vector<16x16xf32>
    %53 = vector.extract_strided_slice %29 {offsets = [0, 32], sizes = [16, 32], strides = [1, 1]} : vector<16x128xf32> to vector<16x32xf32>
    %cst_18 = arith.constant dense<0.000000e+00> : vector<16x32xf32>
    %54 = tpu.matmul %52, %53, %cst_18 {dimension_numbers = #tpu.dot_dimension_numbers<[1], [0], [0], [1], [0, 0, 1, 1], [], []>} : vector<16x16xf32>, vector<16x32xf32>, vector<16x32xf32> -> vector<16x32xf32>
    %55 = vector.extract_strided_slice %43 {offsets = [0, 1], sizes = [16, 1], strides = [1, 1]} : vector<16x4xf32> to vector<16x1xf32>
    %56 = vector.broadcast %55 : vector<16x1xf32> to vector<16x32xf32>
    %57 = arith.mulf %54, %56 : vector<16x32xf32>
    %58 = arith.addf %51, %57 : vector<16x32xf32>
    %59 = vector.extract_strided_slice %39 {offsets = [0, 32], sizes = [16, 16], strides = [1, 1]} : vector<16x64xf32> to vector<16x16xf32>
    %60 = vector.extract_strided_slice %29 {offsets = [0, 64], sizes = [16, 32], strides = [1, 1]} : vector<16x128xf32> to vector<16x32xf32>
    %cst_19 = arith.constant dense<0.000000e+00> : vector<16x32xf32>
    %61 = tpu.matmul %59, %60, %cst_19 {dimension_numbers = #tpu.dot_dimension_numbers<[1], [0], [0], [1], [0, 0, 1, 1], [], []>} : vector<16x16xf32>, vector<16x32xf32>, vector<16x32xf32> -> vector<16x32xf32>
    %62 = vector.extract_strided_slice %43 {offsets = [0, 2], sizes = [16, 1], strides = [1, 1]} : vector<16x4xf32> to vector<16x1xf32>
    %63 = vector.broadcast %62 : vector<16x1xf32> to vector<16x32xf32>
    %64 = arith.mulf %61, %63 : vector<16x32xf32>
    %65 = arith.addf %58, %64 : vector<16x32xf32>
    %66 = vector.extract_strided_slice %39 {offsets = [0, 48], sizes = [16, 16], strides = [1, 1]} : vector<16x64xf32> to vector<16x16xf32>
    %67 = vector.extract_strided_slice %29 {offsets = [0, 96], sizes = [16, 32], strides = [1, 1]} : vector<16x128xf32> to vector<16x32xf32>
    %cst_20 = arith.constant dense<0.000000e+00> : vector<16x32xf32>
    %68 = tpu.matmul %66, %67, %cst_20 {dimension_numbers = #tpu.dot_dimension_numbers<[1], [0], [0], [1], [0, 0, 1, 1], [], []>} : vector<16x16xf32>, vector<16x32xf32>, vector<16x32xf32> -> vector<16x32xf32>
    %69 = vector.extract_strided_slice %43 {offsets = [0, 3], sizes = [16, 1], strides = [1, 1]} : vector<16x4xf32> to vector<16x1xf32>
    %70 = vector.broadcast %69 : vector<16x1xf32> to vector<16x32xf32>
    %71 = arith.mulf %68, %70 : vector<16x32xf32>
    %72 = arith.addf %65, %71 : vector<16x32xf32>
    %73 = arith.addf %13, %72 : vector<16x32xf32>
    %cst_21 = arith.constant dense<0.000000e+00> : vector<16xf32>
    %74 = vector.multi_reduction <add>, %73, %cst_21 [1] : vector<16x32xf32> to vector<16xf32>
    %75 = vector.shape_cast %74 : vector<16xf32> to vector<16x1xf32>
    %76 = arith.mulf %73, %73 : vector<16x32xf32>
    %cst_22 = arith.constant dense<0.000000e+00> : vector<16xf32>
    %77 = vector.multi_reduction <add>, %76, %cst_22 [1] : vector<16x32xf32> to vector<16xf32>
    %78 = vector.shape_cast %77 : vector<16xf32> to vector<16x1xf32>
    %cst_23 = arith.constant 3.125000e-02 : f32
    %79 = vector.broadcast %cst_23 : f32 to vector<16x1xf32>
    %80 = arith.mulf %75, %79 : vector<16x1xf32>
    %cst_24 = arith.constant 3.125000e-02 : f32
    %81 = vector.broadcast %cst_24 : f32 to vector<16x1xf32>
    %82 = arith.mulf %78, %81 : vector<16x1xf32>
    %83 = arith.mulf %80, %80 : vector<16x1xf32>
    %84 = arith.subf %82, %83 : vector<16x1xf32>
    %cst_25 = arith.constant 0.000000e+00 : f32
    %85 = vector.broadcast %cst_25 : f32 to vector<16x1xf32>
    %86 = arith.maximumf %84, %85 : vector<16x1xf32>
    %87 = vector.broadcast %80 : vector<16x1xf32> to vector<16x32xf32>
    %88 = arith.subf %73, %87 : vector<16x32xf32>
    %cst_26 = arith.constant 9.99999974E-6 : f32
    %89 = vector.broadcast %cst_26 : f32 to vector<16x1xf32>
    %90 = arith.addf %86, %89 : vector<16x1xf32>
    %91 = math.rsqrt %90 : vector<16x1xf32>
    %92 = vector.broadcast %91 : vector<16x1xf32> to vector<16x32xf32>
    %93 = arith.mulf %88, %92 : vector<16x32xf32>
    %94 = vector.broadcast %18 : vector<1x32xf32> to vector<16x32xf32>
    %95 = arith.mulf %93, %94 : vector<16x32xf32>
    %96 = vector.broadcast %19 : vector<1x32xf32> to vector<16x32xf32>
    %97 = arith.addf %95, %96 : vector<16x32xf32>
    %c0_27 = arith.constant 0 : index
    %c96 = arith.constant 96 : index
    %c0_28 = arith.constant 0 : index
    %98 = vector.load %arg1[%c0_27, %c96, %c0_28] : memref<2x136x192xf32, #tpu.memory_space<vmem>>, vector<1x32x64xf32>
    %99 = vector.shape_cast %98 : vector<1x32x64xf32> to vector<32x64xf32>
    %c0_29 = arith.constant 0 : index
    %c32 = arith.constant 32 : index
    %c0_30 = arith.constant 0 : index
    %100 = vector.load %arg1[%c0_29, %c32, %c0_30] : memref<2x136x192xf32, #tpu.memory_space<vmem>>, vector<1x64x32xf32>
    %101 = vector.shape_cast %100 : vector<1x64x32xf32> to vector<64x32xf32>
    %cst_31 = arith.constant dense<0.000000e+00> : vector<16x64xf32>
    %102 = tpu.matmul %97, %99, %cst_31 {dimension_numbers = #tpu.dot_dimension_numbers<[1], [0], [0], [1], [0, 0, 1, 1], [], []>} : vector<16x32xf32>, vector<32x64xf32>, vector<16x64xf32> -> vector<16x64xf32>
    %103 = vector.broadcast %20 : vector<1x64xf32> to vector<16x64xf32>
    %104 = arith.addf %102, %103 : vector<16x64xf32>
    %cst_32 = arith.constant 0.000000e+00 : f32
    %105 = vector.broadcast %cst_32 : f32 to vector<16x64xf32>
    %106 = arith.maximumf %104, %105 : vector<16x64xf32>
    %cst_33 = arith.constant dense<0.000000e+00> : vector<16x32xf32>
    %107 = tpu.matmul %106, %101, %cst_33 {dimension_numbers = #tpu.dot_dimension_numbers<[1], [0], [0], [1], [0, 0, 1, 1], [], []>} : vector<16x64xf32>, vector<64x32xf32>, vector<16x32xf32> -> vector<16x32xf32>
    %108 = vector.broadcast %21 : vector<1x32xf32> to vector<16x32xf32>
    %109 = arith.addf %107, %108 : vector<16x32xf32>
    %110 = arith.addf %97, %109 : vector<16x32xf32>
    %cst_34 = arith.constant dense<0.000000e+00> : vector<16xf32>
    %111 = vector.multi_reduction <add>, %110, %cst_34 [1] : vector<16x32xf32> to vector<16xf32>
    %112 = vector.shape_cast %111 : vector<16xf32> to vector<16x1xf32>
    %113 = arith.mulf %110, %110 : vector<16x32xf32>
    %cst_35 = arith.constant dense<0.000000e+00> : vector<16xf32>
    %114 = vector.multi_reduction <add>, %113, %cst_35 [1] : vector<16x32xf32> to vector<16xf32>
    %115 = vector.shape_cast %114 : vector<16xf32> to vector<16x1xf32>
    %cst_36 = arith.constant 3.125000e-02 : f32
    %116 = vector.broadcast %cst_36 : f32 to vector<16x1xf32>
    %117 = arith.mulf %112, %116 : vector<16x1xf32>
    %cst_37 = arith.constant 3.125000e-02 : f32
    %118 = vector.broadcast %cst_37 : f32 to vector<16x1xf32>
    %119 = arith.mulf %115, %118 : vector<16x1xf32>
    %120 = arith.mulf %117, %117 : vector<16x1xf32>
    %121 = arith.subf %119, %120 : vector<16x1xf32>
    %cst_38 = arith.constant 0.000000e+00 : f32
    %122 = vector.broadcast %cst_38 : f32 to vector<16x1xf32>
    %123 = arith.maximumf %121, %122 : vector<16x1xf32>
    %124 = vector.broadcast %117 : vector<16x1xf32> to vector<16x32xf32>
    %125 = arith.subf %110, %124 : vector<16x32xf32>
    %cst_39 = arith.constant 9.99999974E-6 : f32
    %126 = vector.broadcast %cst_39 : f32 to vector<16x1xf32>
    %127 = arith.addf %123, %126 : vector<16x1xf32>
    %128 = math.rsqrt %127 : vector<16x1xf32>
    %129 = vector.broadcast %128 : vector<16x1xf32> to vector<16x32xf32>
    %130 = arith.mulf %125, %129 : vector<16x32xf32>
    %131 = vector.broadcast %22 : vector<1x32xf32> to vector<16x32xf32>
    %132 = arith.mulf %130, %131 : vector<16x32xf32>
    %133 = vector.broadcast %23 : vector<1x32xf32> to vector<16x32xf32>
    %134 = arith.addf %132, %133 : vector<16x32xf32>
    %c1 = arith.constant 1 : index
    %c128_40 = arith.constant 128 : index
    %c0_41 = arith.constant 0 : index
    %135 = vector.load %arg1[%c1, %c128_40, %c0_41] : memref<2x136x192xf32, #tpu.memory_space<vmem>>, vector<1x8x192xf32>
    %136 = vector.shape_cast %135 : vector<1x8x192xf32> to vector<8x192xf32>
    %137 = vector.extract_strided_slice %136 {offsets = [0, 0], sizes = [1, 192], strides = [1, 1]} : vector<8x192xf32> to vector<1x192xf32>
    %138 = vector.extract_strided_slice %136 {offsets = [1, 0], sizes = [1, 32], strides = [1, 1]} : vector<8x192xf32> to vector<1x32xf32>
    %139 = vector.extract_strided_slice %136 {offsets = [2, 0], sizes = [1, 32], strides = [1, 1]} : vector<8x192xf32> to vector<1x32xf32>
    %140 = vector.extract_strided_slice %136 {offsets = [3, 0], sizes = [1, 32], strides = [1, 1]} : vector<8x192xf32> to vector<1x32xf32>
    %141 = vector.extract_strided_slice %136 {offsets = [4, 0], sizes = [1, 64], strides = [1, 1]} : vector<8x192xf32> to vector<1x64xf32>
    %142 = vector.extract_strided_slice %136 {offsets = [5, 0], sizes = [1, 32], strides = [1, 1]} : vector<8x192xf32> to vector<1x32xf32>
    %143 = vector.extract_strided_slice %136 {offsets = [6, 0], sizes = [1, 32], strides = [1, 1]} : vector<8x192xf32> to vector<1x32xf32>
    %144 = vector.extract_strided_slice %136 {offsets = [7, 0], sizes = [1, 32], strides = [1, 1]} : vector<8x192xf32> to vector<1x32xf32>
    %c1_42 = arith.constant 1 : index
    %c0_43 = arith.constant 0 : index
    %c0_44 = arith.constant 0 : index
    %145 = vector.load %arg1[%c1_42, %c0_43, %c0_44] : memref<2x136x192xf32, #tpu.memory_space<vmem>>, vector<1x32x192xf32>
    %146 = vector.shape_cast %145 : vector<1x32x192xf32> to vector<32x192xf32>
    %cst_45 = arith.constant dense<0.000000e+00> : vector<16x192xf32>
    %147 = tpu.matmul %134, %146, %cst_45 {dimension_numbers = #tpu.dot_dimension_numbers<[1], [0], [0], [1], [0, 0, 1, 1], [], []>} : vector<16x32xf32>, vector<32x192xf32>, vector<16x192xf32> -> vector<16x192xf32>
    %148 = vector.broadcast %137 : vector<1x192xf32> to vector<16x192xf32>
    %149 = arith.addf %147, %148 : vector<16x192xf32>
    %150 = vector.extract_strided_slice %149 {offsets = [0, 0], sizes = [16, 32], strides = [1, 1]} : vector<16x192xf32> to vector<16x32xf32>
    %151 = vector.extract_strided_slice %149 {offsets = [0, 32], sizes = [16, 32], strides = [1, 1]} : vector<16x192xf32> to vector<16x32xf32>
    %152 = vector.extract_strided_slice %149 {offsets = [0, 64], sizes = [16, 128], strides = [1, 1]} : vector<16x192xf32> to vector<16x128xf32>
    %153 = tpu.transpose %151, [1, 0] : vector<16x32xf32> -> vector<32x16xf32>
    %154 = tpu.concatenate %153, %153, %153, %153 in 1 : vector<32x16xf32>, vector<32x16xf32>, vector<32x16xf32>, vector<32x16xf32> -> vector<32x64xf32>
    %155 = arith.mulf %154, %3 : vector<32x64xf32>
    %cst_46 = arith.constant dense<0.000000e+00> : vector<16x64xf32>
    %156 = tpu.matmul %150, %155, %cst_46 {dimension_numbers = #tpu.dot_dimension_numbers<[1], [0], [0], [1], [0, 0, 1, 1], [], []>} : vector<16x32xf32>, vector<32x64xf32>, vector<16x64xf32> -> vector<16x64xf32>
    %157 = arith.addf %156, %4 : vector<16x64xf32>
    %cst_47 = arith.constant dense<0xFF800000> : vector<16xf32>
    %158 = vector.multi_reduction <maximumf>, %157, %cst_47 [1] : vector<16x64xf32> to vector<16xf32>
    %159 = vector.shape_cast %158 : vector<16xf32> to vector<16x1xf32>
    %160 = vector.broadcast %159 : vector<16x1xf32> to vector<16x64xf32>
    %161 = arith.subf %157, %160 : vector<16x64xf32>
    %162 = math.exp %161 : vector<16x64xf32>
    %cst_48 = arith.constant dense<0.000000e+00> : vector<16x4xf32>
    %163 = tpu.matmul %162, %5, %cst_48 {dimension_numbers = #tpu.dot_dimension_numbers<[1], [0], [0], [1], [0, 0, 1, 1], [], []>} : vector<16x64xf32>, vector<64x4xf32>, vector<16x4xf32> -> vector<16x4xf32>
    %cst_49 = arith.constant 1.000000e-30 : f32
    %164 = vector.broadcast %cst_49 : f32 to vector<16x4xf32>
    %165 = arith.maximumf %163, %164 : vector<16x4xf32>
    %166 = tpu.reciprocal %165 {approx = true} : vector<16x4xf32> -> vector<16x4xf32>
    %167 = vector.extract_strided_slice %162 {offsets = [0, 0], sizes = [16, 16], strides = [1, 1]} : vector<16x64xf32> to vector<16x16xf32>
    %168 = vector.extract_strided_slice %152 {offsets = [0, 0], sizes = [16, 32], strides = [1, 1]} : vector<16x128xf32> to vector<16x32xf32>
    %cst_50 = arith.constant dense<0.000000e+00> : vector<16x32xf32>
    %169 = tpu.matmul %167, %168, %cst_50 {dimension_numbers = #tpu.dot_dimension_numbers<[1], [0], [0], [1], [0, 0, 1, 1], [], []>} : vector<16x16xf32>, vector<16x32xf32>, vector<16x32xf32> -> vector<16x32xf32>
    %170 = vector.extract_strided_slice %166 {offsets = [0, 0], sizes = [16, 1], strides = [1, 1]} : vector<16x4xf32> to vector<16x1xf32>
    %171 = vector.broadcast %170 : vector<16x1xf32> to vector<16x32xf32>
    %172 = arith.mulf %169, %171 : vector<16x32xf32>
    %173 = vector.broadcast %138 : vector<1x32xf32> to vector<16x32xf32>
    %174 = arith.addf %173, %172 : vector<16x32xf32>
    %175 = vector.extract_strided_slice %162 {offsets = [0, 16], sizes = [16, 16], strides = [1, 1]} : vector<16x64xf32> to vector<16x16xf32>
    %176 = vector.extract_strided_slice %152 {offsets = [0, 32], sizes = [16, 32], strides = [1, 1]} : vector<16x128xf32> to vector<16x32xf32>
    %cst_51 = arith.constant dense<0.000000e+00> : vector<16x32xf32>
    %177 = tpu.matmul %175, %176, %cst_51 {dimension_numbers = #tpu.dot_dimension_numbers<[1], [0], [0], [1], [0, 0, 1, 1], [], []>} : vector<16x16xf32>, vector<16x32xf32>, vector<16x32xf32> -> vector<16x32xf32>
    %178 = vector.extract_strided_slice %166 {offsets = [0, 1], sizes = [16, 1], strides = [1, 1]} : vector<16x4xf32> to vector<16x1xf32>
    %179 = vector.broadcast %178 : vector<16x1xf32> to vector<16x32xf32>
    %180 = arith.mulf %177, %179 : vector<16x32xf32>
    %181 = arith.addf %174, %180 : vector<16x32xf32>
    %182 = vector.extract_strided_slice %162 {offsets = [0, 32], sizes = [16, 16], strides = [1, 1]} : vector<16x64xf32> to vector<16x16xf32>
    %183 = vector.extract_strided_slice %152 {offsets = [0, 64], sizes = [16, 32], strides = [1, 1]} : vector<16x128xf32> to vector<16x32xf32>
    %cst_52 = arith.constant dense<0.000000e+00> : vector<16x32xf32>
    %184 = tpu.matmul %182, %183, %cst_52 {dimension_numbers = #tpu.dot_dimension_numbers<[1], [0], [0], [1], [0, 0, 1, 1], [], []>} : vector<16x16xf32>, vector<16x32xf32>, vector<16x32xf32> -> vector<16x32xf32>
    %185 = vector.extract_strided_slice %166 {offsets = [0, 2], sizes = [16, 1], strides = [1, 1]} : vector<16x4xf32> to vector<16x1xf32>
    %186 = vector.broadcast %185 : vector<16x1xf32> to vector<16x32xf32>
    %187 = arith.mulf %184, %186 : vector<16x32xf32>
    %188 = arith.addf %181, %187 : vector<16x32xf32>
    %189 = vector.extract_strided_slice %162 {offsets = [0, 48], sizes = [16, 16], strides = [1, 1]} : vector<16x64xf32> to vector<16x16xf32>
    %190 = vector.extract_strided_slice %152 {offsets = [0, 96], sizes = [16, 32], strides = [1, 1]} : vector<16x128xf32> to vector<16x32xf32>
    %cst_53 = arith.constant dense<0.000000e+00> : vector<16x32xf32>
    %191 = tpu.matmul %189, %190, %cst_53 {dimension_numbers = #tpu.dot_dimension_numbers<[1], [0], [0], [1], [0, 0, 1, 1], [], []>} : vector<16x16xf32>, vector<16x32xf32>, vector<16x32xf32> -> vector<16x32xf32>
    %192 = vector.extract_strided_slice %166 {offsets = [0, 3], sizes = [16, 1], strides = [1, 1]} : vector<16x4xf32> to vector<16x1xf32>
    %193 = vector.broadcast %192 : vector<16x1xf32> to vector<16x32xf32>
    %194 = arith.mulf %191, %193 : vector<16x32xf32>
    %195 = arith.addf %188, %194 : vector<16x32xf32>
    %196 = arith.addf %134, %195 : vector<16x32xf32>
    %cst_54 = arith.constant dense<0.000000e+00> : vector<16xf32>
    %197 = vector.multi_reduction <add>, %196, %cst_54 [1] : vector<16x32xf32> to vector<16xf32>
    %198 = vector.shape_cast %197 : vector<16xf32> to vector<16x1xf32>
    %199 = arith.mulf %196, %196 : vector<16x32xf32>
    %cst_55 = arith.constant dense<0.000000e+00> : vector<16xf32>
    %200 = vector.multi_reduction <add>, %199, %cst_55 [1] : vector<16x32xf32> to vector<16xf32>
    %201 = vector.shape_cast %200 : vector<16xf32> to vector<16x1xf32>
    %cst_56 = arith.constant 3.125000e-02 : f32
    %202 = vector.broadcast %cst_56 : f32 to vector<16x1xf32>
    %203 = arith.mulf %198, %202 : vector<16x1xf32>
    %cst_57 = arith.constant 3.125000e-02 : f32
    %204 = vector.broadcast %cst_57 : f32 to vector<16x1xf32>
    %205 = arith.mulf %201, %204 : vector<16x1xf32>
    %206 = arith.mulf %203, %203 : vector<16x1xf32>
    %207 = arith.subf %205, %206 : vector<16x1xf32>
    %cst_58 = arith.constant 0.000000e+00 : f32
    %208 = vector.broadcast %cst_58 : f32 to vector<16x1xf32>
    %209 = arith.maximumf %207, %208 : vector<16x1xf32>
    %210 = vector.broadcast %203 : vector<16x1xf32> to vector<16x32xf32>
    %211 = arith.subf %196, %210 : vector<16x32xf32>
    %cst_59 = arith.constant 9.99999974E-6 : f32
    %212 = vector.broadcast %cst_59 : f32 to vector<16x1xf32>
    %213 = arith.addf %209, %212 : vector<16x1xf32>
    %214 = math.rsqrt %213 : vector<16x1xf32>
    %215 = vector.broadcast %214 : vector<16x1xf32> to vector<16x32xf32>
    %216 = arith.mulf %211, %215 : vector<16x32xf32>
    %217 = vector.broadcast %139 : vector<1x32xf32> to vector<16x32xf32>
    %218 = arith.mulf %216, %217 : vector<16x32xf32>
    %219 = vector.broadcast %140 : vector<1x32xf32> to vector<16x32xf32>
    %220 = arith.addf %218, %219 : vector<16x32xf32>
    %c1_60 = arith.constant 1 : index
    %c96_61 = arith.constant 96 : index
    %c0_62 = arith.constant 0 : index
    %221 = vector.load %arg1[%c1_60, %c96_61, %c0_62] : memref<2x136x192xf32, #tpu.memory_space<vmem>>, vector<1x32x64xf32>
    %222 = vector.shape_cast %221 : vector<1x32x64xf32> to vector<32x64xf32>
    %c1_63 = arith.constant 1 : index
    %c32_64 = arith.constant 32 : index
    %c0_65 = arith.constant 0 : index
    %223 = vector.load %arg1[%c1_63, %c32_64, %c0_65] : memref<2x136x192xf32, #tpu.memory_space<vmem>>, vector<1x64x32xf32>
    %224 = vector.shape_cast %223 : vector<1x64x32xf32> to vector<64x32xf32>
    %cst_66 = arith.constant dense<0.000000e+00> : vector<16x64xf32>
    %225 = tpu.matmul %220, %222, %cst_66 {dimension_numbers = #tpu.dot_dimension_numbers<[1], [0], [0], [1], [0, 0, 1, 1], [], []>} : vector<16x32xf32>, vector<32x64xf32>, vector<16x64xf32> -> vector<16x64xf32>
    %226 = vector.broadcast %141 : vector<1x64xf32> to vector<16x64xf32>
    %227 = arith.addf %225, %226 : vector<16x64xf32>
    %cst_67 = arith.constant 0.000000e+00 : f32
    %228 = vector.broadcast %cst_67 : f32 to vector<16x64xf32>
    %229 = arith.maximumf %227, %228 : vector<16x64xf32>
    %cst_68 = arith.constant dense<0.000000e+00> : vector<16x32xf32>
    %230 = tpu.matmul %229, %224, %cst_68 {dimension_numbers = #tpu.dot_dimension_numbers<[1], [0], [0], [1], [0, 0, 1, 1], [], []>} : vector<16x64xf32>, vector<64x32xf32>, vector<16x32xf32> -> vector<16x32xf32>
    %231 = vector.broadcast %142 : vector<1x32xf32> to vector<16x32xf32>
    %232 = arith.addf %230, %231 : vector<16x32xf32>
    %233 = arith.addf %220, %232 : vector<16x32xf32>
    %cst_69 = arith.constant dense<0.000000e+00> : vector<16xf32>
    %234 = vector.multi_reduction <add>, %233, %cst_69 [1] : vector<16x32xf32> to vector<16xf32>
    %235 = vector.shape_cast %234 : vector<16xf32> to vector<16x1xf32>
    %236 = arith.mulf %233, %233 : vector<16x32xf32>
    %cst_70 = arith.constant dense<0.000000e+00> : vector<16xf32>
    %237 = vector.multi_reduction <add>, %236, %cst_70 [1] : vector<16x32xf32> to vector<16xf32>
    %238 = vector.shape_cast %237 : vector<16xf32> to vector<16x1xf32>
    %cst_71 = arith.constant 3.125000e-02 : f32
    %239 = vector.broadcast %cst_71 : f32 to vector<16x1xf32>
    %240 = arith.mulf %235, %239 : vector<16x1xf32>
    %cst_72 = arith.constant 3.125000e-02 : f32
    %241 = vector.broadcast %cst_72 : f32 to vector<16x1xf32>
    %242 = arith.mulf %238, %241 : vector<16x1xf32>
    %243 = arith.mulf %240, %240 : vector<16x1xf32>
    %244 = arith.subf %242, %243 : vector<16x1xf32>
    %cst_73 = arith.constant 0.000000e+00 : f32
    %245 = vector.broadcast %cst_73 : f32 to vector<16x1xf32>
    %246 = arith.maximumf %244, %245 : vector<16x1xf32>
    %247 = vector.broadcast %240 : vector<16x1xf32> to vector<16x32xf32>
    %248 = arith.subf %233, %247 : vector<16x32xf32>
    %cst_74 = arith.constant 9.99999974E-6 : f32
    %249 = vector.broadcast %cst_74 : f32 to vector<16x1xf32>
    %250 = arith.addf %246, %249 : vector<16x1xf32>
    %251 = math.rsqrt %250 : vector<16x1xf32>
    %252 = vector.broadcast %251 : vector<16x1xf32> to vector<16x32xf32>
    %253 = arith.mulf %248, %252 : vector<16x32xf32>
    %254 = vector.broadcast %143 : vector<1x32xf32> to vector<16x32xf32>
    %255 = arith.mulf %253, %254 : vector<16x32xf32>
    %256 = vector.broadcast %144 : vector<1x32xf32> to vector<16x32xf32>
    %257 = arith.addf %255, %256 : vector<16x32xf32>
    %cst_75 = arith.constant dense<0.000000e+00> : vector<16x128xf32>
    %258 = tpu.matmul %257, %2, %cst_75 {dimension_numbers = #tpu.dot_dimension_numbers<[1], [0], [0], [1], [0, 0, 1, 1], [], []>} : vector<16x32xf32>, vector<32x128xf32>, vector<16x128xf32> -> vector<16x128xf32>
    %259 = vector.broadcast %6 : vector<1x128xf32> to vector<16x128xf32>
    %260 = arith.addf %258, %259 : vector<16x128xf32>
    %c0_76 = arith.constant 0 : index
    %c0_77 = arith.constant 0 : index
    %261 = vector.load %arg3[%c0_76, %c0_77] : memref<16x128xf32, #tpu.memory_space<vmem>>, vector<16x128xf32>
    tpu.vector_store %arg3[%c0_76, %c0_77], %260 {strides = array<i32>} : memref<16x128xf32, #tpu.memory_space<vmem>>, vector<16x128xf32>,
    return
  }
}

</mosaic_0001>

<llo_original>
// kernel: forward.1
$region0: #{forward.1}
  #allocation0 [shape = 'u32[]', space=smem, size = 0x4, offset = 0x4, fixed_abs, tag = 'smem constant byte address 0x4 - core index']
  #allocation1 [shape = 'u32[144,128]{1,0:T(1,128)}', space=vmem, size = 0x12000, scoped, tag = 'internal scratch']
  %s0 = inlined_call_operand.vmem [shape: s32[16,1], index: 0, kind: input, shape index: {}]
  %s1 = inlined_call_operand.hbm [shape: f32[2,136,192], index: 1, kind: input, shape index: {}]
  %s2 = inlined_call_operand.hbm [shape: f32[280,192], index: 2, kind: input, shape index: {}]
  %s3 = inlined_call_operand.vmem [shape: f32[16,128], index: 3, kind: output, shape index: {}]
  %s4 = sld [smem:[#allocation0]]
  $region30: #{forward.1} parent=0
    _
  %s6 = ssub.s32 1, %s4
  %s7 = scalar_select 0, %s6, %s4
  $region1: #{forward.1} parent=0
    #allocation2 [shape = 'u8[278528]{0}', space=vmem, size = 0x44000, scoped, tag = 'input window, operand 1, single buffered']
    #allocation3 [shape = 's32[1]{0}', space=sflag, size = 0x4, scoped, tag = 'scoped memory for forward.1']
    #allocation4 [shape = 'u8[286720]{0}', space=vmem, size = 0x46000, scoped, tag = 'input window, operand 2, single buffered']
    #allocation5 [shape = 's32[1]{0}', space=sflag, size = 0x4, scoped, tag = 'scoped memory for forward.1']
    %8 = vsyncpa [#allocation3], 0
    %9 = vsyncpa [#allocation5], 0
    // Predicated region
    $region2: #{forward.1} parent=1 // pred_check
      _
    $region3: #{forward.1} parent=1 // pred_check_branch
      %11 = sbr.rel (0) target = $region5
    $region4: #{forward.1} parent=1 // pred_region
      _
    $region5: #{forward.1} parent=1 // pred_fallthru
      _
    // Predicated region
    $region6: #{forward.1} parent=1 // pred_check
      _
    $region7: #{forward.1} parent=1 // pred_check_branch
      %13 = sbr.rel (0) target = $region9
    $region8: #{forward.1} parent=1 // pred_region
      %s15 = ssub.s32 8704, 8704
      %16 = vsyncadd [#allocation3], %s15
      %s17 = sshll.u32 [#allocation2], 4
      %s18 = int_to_ptr.vmem [resolvable:$true] %s17
      %23 = dma.hbm_to_vmem [thread:$0]  %s1, 8704, %s18, [#allocation3], 256, 256, 16
    $region9: #{forward.1} parent=1 // pred_fallthru
      _
    // Predicated region
    $region10: #{forward.1} parent=1 // pred_check
      _
    $region11: #{forward.1} parent=1 // pred_check_branch
      %25 = sbr.rel (0) target = $region13
    $region12: #{forward.1} parent=1 // pred_region
      %s27 = ssub.s32 8960, 8960
      %28 = vsyncadd [#allocation5], %s27
      %s29 = sshll.u32 [#allocation4], 4
      %s30 = int_to_ptr.vmem [resolvable:$true] %s29
      %35 = dma.hbm_to_vmem [thread:$0]  %s2, 8960, %s30, [#allocation5], 256, 256, 16
    $region13: #{forward.1} parent=1 // pred_fallthru
      _
    // Predicated region
    $region14: #{forward.1} parent=1 // pred_check
      _
    $region15: #{forward.1} parent=1 // pred_check_branch
      %37 = sbr.rel (0) target = $region17
    $region16: #{forward.1} parent=1 // pred_region
      %38 = dma.done [#allocation3], 8704
    $region17: #{forward.1} parent=1 // pred_fallthru
      _
    // Predicated region
    $region18: #{forward.1} parent=1 // pred_check
      _
    $region19: #{forward.1} parent=1 // pred_check_branch
      %40 = sbr.rel (0) target = $region21
    $region20: #{forward.1} parent=1 // pred_region
      %41 = dma.done [#allocation5], 8960
    $region21: #{forward.1} parent=1 // pred_fallthru
      _
    %v42 = vld [vmem:[#allocation4] sm:$0xff]
    %v43 = vld [vmem:[#allocation4 + $0x10] sm:$0xff]
    %v44 = vld [vmem:[#allocation4 + $0x20] sm:$0xff]
    %v45 = vld [vmem:[#allocation4 + $0x30] sm:$0xff]
    %v46 = vld [vmem:[#allocation4 + $0x40] sm:$0xff]
    %v47 = vld [vmem:[#allocation4 + $0x50] sm:$0xff]
    %v48 = vld [vmem:[#allocation4 + $0x60] sm:$0xff]
    %v49 = vld [vmem:[#allocation4 + $0x70] sm:$0xff]
    %v50 = vld [vmem:[#allocation4 + $0x80] sm:$0xff]
    %v51 = vld [vmem:[#allocation4 + $0x88] sm:$0xff]
    %v52 = vld [vmem:[#allocation4 + $0x90] sm:$0xff]
    %v53 = vld [vmem:[#allocation4 + $0x98] sm:$0xff]
    %v54 = vld [vmem:[#allocation4 + $0xa0] sm:$0xff]
    %v55 = vld [vmem:[#allocation4 + $0xa8] sm:$0xff]
    %v56 = vld [vmem:[#allocation4 + $0xb0] sm:$0xff]
    %v57 = vld [vmem:[#allocation4 + $0xb8] sm:$0xff]
    %v58 = vld [vmem:[#allocation4 + $0xc0] sm:$0xff]
    %v59 = vld [vmem:[#allocation4 + $0xc8] sm:$0xff]
    %v60 = vld [vmem:[#allocation4 + $0xd0] sm:$0xff]
    %v61 = vld [vmem:[#allocation4 + $0xd8] sm:$0xff]
    %v62 = vld [vmem:[#allocation4 + $0xe0] sm:$0xff]
    %v63 = vld [vmem:[#allocation4 + $0xe8] sm:$0xff]
    %v64 = vld [vmem:[#allocation4 + $0xf0] sm:$0xff]
    %v65 = vld [vmem:[#allocation4 + $0xf8] sm:$0xff]
    %v66 = vld [vmem:[#allocation4 + $0x100] sm:$0xff]
    %v67 = vld [vmem:[#allocation4 + $0x110] sm:$0xff]
    %v68 = vld [vmem:[#allocation4 + $0x120] sm:$0xff]
    %v69 = vld [vmem:[#allocation4 + $0x130] sm:$0xff]
    %v70 = vld [vmem:[#allocation4 + $0x140] sm:$0xff]
    %v71 = vld [vmem:[#allocation4 + $0x150] sm:$0xff]
    %v72 = vld [vmem:[#allocation4 + $0x160] sm:$0xff]
    %v73 = vld [vmem:[#allocation4 + $0x170] sm:$0xff]
    %v74 = vld [vmem:[#allocation4 + $0x180] sm:$0xff]
    %v75 = vld [vmem:[#allocation4 + $0x190] sm:$0xff]
    %v76 = vld [vmem:[#allocation4 + $0x1a0] sm:$0xff]
    %v77 = vld [vmem:[#allocation4 + $0x1b0] sm:$0xff]
    %v78 = vld [vmem:[#allocation4 + $0x1c0] sm:$0xff]
    %v79 = vld [vmem:[#allocation4 + $0x1d0] sm:$0xff]
    %v80 = vld [vmem:[#allocation4 + $0x1e0] sm:$0xff]
    %v81 = vld [vmem:[#allocation4 + $0x1f0] sm:$0xff]
    %v82 = vld [vmem:[#allocation4 + $0x200] sm:$0xff]
    %v83 = vld [vmem:[#allocation4 + $0x210] sm:$0xff]
    %v84 = vld [vmem:[#allocation4 + $0x220] ss:$0 sm:$0xff]
    %v85 = vlaneseq
    %v86 = vand.u32 %v85, 127
    %v87 = vld [vmem:[%s0] sm:$0xff]
    %v88 = vld [vmem:[%s0 + $0x8] sm:$0xff]
    %89 = vset.pattern.permute.xlu0 0
    %90 = vperm.xlu0 %89, %v87
    %v91 = vpop.permute.xlu0 %90
    %92 = vset.pattern.permute.xlu0 0
    %93 = vperm.xlu0 %92, %v88
    %v94 = vpop.permute.xlu0 %93
    %vm95 = vcmp.eq.s32.totalorder %v86, %v91
    %vm96 = vcmp.eq.s32.totalorder %v86, %v94
    %v97 = vsel %vm95, 1, 0
    %v98 = vsel %vm96, 1, 0
    %v99 = vcvt.s32.f32 %v97
    %v100 = vcvt.s32.f32 %v98
    %v101 = vld [vmem:[#allocation2 + $0x100] sm:$0xff]
    %v102 = vld [vmem:[#allocation2 + $0x108] sm:$0xff]
    %v103 = vlaneseq
    %v104 = vshrl.u32 %v103, 7
    %v105 = vsub.s32 0, %v104
    %v106 = vrot.slane %v101, %v105
    %v107 = vlaneseq
    %v108 = vshrl.u32 %v107, 7
    %v109 = vsub.s32 0, %v108
    %v110 = vrot.slane %v102, %v109
    %vm111 = vcmask 523264
    %v113 = vsel %vm111, %v99, 0
    %v116 = vsel %vm111, %v100, 0
    %118 = vmatprep.subr.mxu0 %v51
    %119 = vmatpush1.msra.mxu0 %v50
    %120 = vmatprep.subr.mxu0 %v53
    %121 = vmatpush1.msra.mxu0 %v52
    %122 = vmatprep.subr.mxu0 %v55
    %123 = vmatpush1.msra.mxu0 %v54
    %124 = vmatprep.subr.mxu0 %v57
    %125 = vmatpush1.msra.mxu0 %v56
    %126 = vmatprep.subr.mxu0 %v59
    %127 = vmatpush1.msra.mxu0 %v58
    %128 = vmatprep.subr.mxu0 %v61
    %129 = vmatpush1.msra.mxu0 %v60
    %130 = vmatprep.subr.mxu0 %v63
    %131 = vmatpush1.msra.mxu0 %v62
    %132 = vmatprep.subr.mxu0 %v65
    %133 = vmatpush1.msra.mxu0 %v64
    %134 = vmatprep.subr.mxu0 0.0
    %135 = vmatpush1.msra.mxu0 0.0
    %136 = vmatprep.subr.mxu0 0.0
    %137 = vmatpush1.msra.mxu0 0.0
    %138 = vmatprep.subr.mxu0 0.0
    %139 = vmatpush1.msra.mxu0 0.0
    %140 = vmatprep.subr.mxu0 0.0
    %141 = vmatpush1.msra.mxu0 0.0
    %142 = vmatprep.subr.mxu0 0.0
    %143 = vmatpush1.msra.mxu0 0.0
    %144 = vmatprep.subr.mxu0 0.0
    %145 = vmatpush1.msra.mxu0 0.0
    %146 = vmatprep.subr.mxu0 0.0
    %147 = vmatpush1.msra.mxu0 0.0
    %148 = vmatprep.subr.mxu0 0.0
    %149 = vmatpush1.msra.mxu0 0.0
    %150 = vmatprep.subr.mxu0 0.0
    %151 = vmatpush1.msra.mxu0 0.0
    %152 = vmatprep.subr.mxu0 0.0
    %153 = vmatpush1.msra.mxu0 0.0
    %154 = vmatprep.subr.mxu0 0.0
    %155 = vmatpush1.msra.mxu0 0.0
    %156 = vmatprep.subr.mxu0 0.0
    %157 = vmatpush1.msra.mxu0 0.0
    %158 = vmatprep.subr.mxu0 0.0
    %159 = vmatpush1.msra.mxu0 0.0
    %160 = vmatprep.subr.mxu0 0.0
    %161 = vmatpush1.msra.mxu0 0.0
    %162 = vmatprep.subr.mxu0 0.0
    %163 = vmatpush1.msra.mxu0 0.0
    %164 = vmatprep.subr.mxu0 0.0
    %165 = vmatpush1.msra.mxu0 0.0
    %166 = vmatprep.subr.mxu0 0.0
    %167 = vmatpush1.msra.mxu0 0.0
    %168 = vmatprep.subr.mxu0 0.0
    %169 = vmatpush1.msra.mxu0 0.0
    %170 = vmatprep.subr.mxu0 0.0
    %171 = vmatpush1.msra.mxu0 0.0
    %172 = vmatprep.subr.mxu0 0.0
    %173 = vmatpush1.msra.mxu0 0.0
    %174 = vmatprep.subr.mxu0 0.0
    %175 = vmatpush1.msra.mxu0 0.0
    %176 = vmatprep.subr.mxu0 0.0
    %177 = vmatpush1.msra.mxu0 0.0
    %178 = vmatprep.subr.mxu0 0.0
    %179 = vmatpush1.msra.mxu0 0.0
    %180 = vmatprep.subr.mxu0 0.0
    %181 = vmatpush1.msra.mxu0 0.0
    %182 = vmatprep.mubr.f32.mxu0 0.0
    %183 = vmatmul.mubr.f32.gmra.mrb[0].mxu0 %v113
    %v184 = vpop.f32.mrb[0].mxu0
    %v185 = vadd.f32 %v106, %v184
    %v186 = vpop.f32.mrb[0].mxu0
    %v187 = vadd.f32 %v110, %v186
    %188 = vmatprep.mubr.f32.mxu0 0.0
    %189 = vmatmul.mubr.f32.gmra.mrb[0].mxu0 %v116
    %v190 = vpop.f32.mrb[0].mxu0
    %v191 = vadd.f32 %v106, %v190
    %v192 = vpop.f32.mrb[0].mxu0
    %v193 = vadd.f32 %v110, %v192
    %194 = vdwg.mxu0
    %197 = vrot.lane.b32.xlu0 %v185, 96
    %v198 = vpop.permute.xlu0 %197
    %199 = vrot.lane.b32.xlu0 %v191, 96
    %v200 = vpop.permute.xlu0 %199
    %203 = vxpose.xlu0.b32.start [1/16] %v198, 128
    %204 = vxpose.xlu0.b32.cont [2/16] %v200, 128
    %205 = vxpose.xlu0.b32.cont [3/16] 0.0, 128
    %206 = vxpose.xlu0.b32.cont [4/16] 0.0, 128
    %207 = vxpose.xlu0.b32.cont [5/16] 0.0, 128
    %208 = vxpose.xlu0.b32.cont [6/16] 0.0, 128
    %209 = vxpose.xlu0.b32.cont [7/16] 0.0, 128
    %210 = vxpose.xlu0.b32.cont [8/16] 0.0, 128
    %211 = vxpose.xlu0.b32.cont [9/16] 0.0, 128
    %212 = vxpose.xlu0.b32.cont [10/16] 0.0, 128
    %213 = vxpose.xlu0.b32.cont [11/16] 0.0, 128
    %214 = vxpose.xlu0.b32.cont [12/16] 0.0, 128
    %215 = vxpose.xlu0.b32.cont [13/16] 0.0, 128
    %216 = vxpose.xlu0.b32.cont [14/16] 0.0, 128
    %217 = vxpose.xlu0.b32.cont [15/16] 0.0, 128
    %218 = vxpose.xlu0.b32.end [16/16] 0.0, 128
    %v219 = vpop.trf.xlu0
    %v220 = vpop.trf.xlu0
    %v221 = vpop.trf.xlu0
    %v222 = vpop.trf.xlu0
    %v223 = vpop.trf.xlu0
    %v224 = vpop.trf.xlu0
    %v225 = vpop.trf.xlu0
    %v226 = vpop.trf.xlu0
    %v227 = vpop.trf.xlu0
    %v228 = vpop.trf.xlu0
    %v229 = vpop.trf.xlu0
    %v230 = vpop.trf.xlu0
    %v231 = vpop.trf.xlu0
    %v232 = vpop.trf.xlu0
    %v233 = vpop.trf.xlu0
    %v234 = vpop.trf.xlu0
    %239 = vrot.lane.b32.xlu0 %v219, 16
    %v240 = vpop.permute.xlu0 %239
    %241 = vrot.lane.b32.xlu0 %v220, 16
    %v242 = vpop.permute.xlu0 %241
    %243 = vrot.lane.b32.xlu0 %v221, 16
    %v244 = vpop.permute.xlu0 %243
    %245 = vrot.lane.b32.xlu0 %v222, 16
    %v246 = vpop.permute.xlu0 %245
    %251 = vrot.lane.b32.xlu0 %v219, 32
    %v252 = vpop.permute.xlu0 %251
    %253 = vrot.lane.b32.xlu0 %v220, 32
    %v254 = vpop.permute.xlu0 %253
    %255 = vrot.lane.b32.xlu0 %v221, 32
    %v256 = vpop.permute.xlu0 %255
    %257 = vrot.lane.b32.xlu0 %v222, 32
    %v258 = vpop.permute.xlu0 %257
    %263 = vrot.lane.b32.xlu0 %v219, 48
    %v264 = vpop.permute.xlu0 %263
    %265 = vrot.lane.b32.xlu0 %v220, 48
    %v266 = vpop.permute.xlu0 %265
    %267 = vrot.lane.b32.xlu0 %v221, 48
    %v268 = vpop.permute.xlu0 %267
    %269 = vrot.lane.b32.xlu0 %v222, 48
    %v270 = vpop.permute.xlu0 %269
    %vm275 = vcmask 130048
    %v276 = vsel %vm275, %v219, %v240
    %v277 = vsel %vm275, %v220, %v242
    %v278 = vsel %vm275, %v221, %v244
    %v279 = vsel %vm275, %v222, %v246
    %vm280 = vcmask 261120
    %v281 = vsel %vm280, %v276, %v252
    %v282 = vsel %vm280, %v277, %v254
    %v283 = vsel %vm280, %v278, %v256
    %v284 = vsel %vm280, %v279, %v258
    %vm285 = vcmask 392192
    %v286 = vsel %vm285, %v281, %v264
    %v287 = vsel %vm285, %v282, %v266
    %v288 = vsel %vm285, %v283, %v268
    %v289 = vsel %vm285, %v284, %v270
    %v290 = vmul.f32 %v286, %v70
    %v291 = vmul.f32 %v287, %v71
    %v292 = vmul.f32 %v288, %v72
    %v293 = vmul.f32 %v289, %v73
    %v294 = vsel %vm280, %v185, 0
    %v296 = vsel %vm280, %v191, 0
    %298 = vmatprep.subr.mxu0 0.0
    %299 = vmatpush1.msra.mxu0 %v290
    %300 = vmatprep.subr.mxu0 0.0
    %301 = vmatpush1.msra.mxu0 %v291
    %302 = vmatprep.subr.mxu0 0.0
    %303 = vmatpush1.msra.mxu0 %v292
    %304 = vmatprep.subr.mxu0 0.0
    %305 = vmatpush1.msra.mxu0 %v293
    %306 = vmatprep.subr.mxu0 0.0
    %307 = vmatpush1.msra.mxu0 0.0
    %308 = vmatprep.subr.mxu0 0.0
    %309 = vmatpush1.msra.mxu0 0.0
    %310 = vmatprep.subr.mxu0 0.0
    %311 = vmatpush1.msra.mxu0 0.0
    %312 = vmatprep.subr.mxu0 0.0
    %313 = vmatpush1.msra.mxu0 0.0
    %314 = vmatprep.subr.mxu0 0.0
    %315 = vmatpush1.msra.mxu0 0.0
    %316 = vmatprep.subr.mxu0 0.0
    %317 = vmatpush1.msra.mxu0 0.0
    %318 = vmatprep.subr.mxu0 0.0
    %319 = vmatpush1.msra.mxu0 0.0
    %320 = vmatprep.subr.mxu0 0.0
    %321 = vmatpush1.msra.mxu0 0.0
    %322 = vmatprep.subr.mxu0 0.0
    %323 = vmatpush1.msra.mxu0 0.0
    %324 = vmatprep.subr.mxu0 0.0
    %325 = vmatpush1.msra.mxu0 0.0
    %326 = vmatprep.subr.mxu0 0.0
    %327 = vmatpush1.msra.mxu0 0.0
    %328 = vmatprep.subr.mxu0 0.0
    %329 = vmatpush1.msra.mxu0 0.0
    %330 = vmatprep.subr.mxu0 0.0
    %331 = vmatpush1.msra.mxu0 0.0
    %332 = vmatprep.subr.mxu0 0.0
    %333 = vmatpush1.msra.mxu0 0.0
    %334 = vmatprep.subr.mxu0 0.0
    %335 = vmatpush1.msra.mxu0 0.0
    %336 = vmatprep.subr.mxu0 0.0
    %337 = vmatpush1.msra.mxu0 0.0
    %338 = vmatprep.subr.mxu0 0.0
    %339 = vmatpush1.msra.mxu0 0.0
    %340 = vmatprep.subr.mxu0 0.0
    %341 = vmatpush1.msra.mxu0 0.0
    %342 = vmatprep.subr.mxu0 0.0
    %343 = vmatpush1.msra.mxu0 0.0
    %344 = vmatprep.subr.mxu0 0.0
    %345 = vmatpush1.msra.mxu0 0.0
    %346 = vmatprep.subr.mxu0 0.0
    %347 = vmatpush1.msra.mxu0 0.0
    %348 = vmatprep.subr.mxu0 0.0
    %349 = vmatpush1.msra.mxu0 0.0
    %350 = vmatprep.subr.mxu0 0.0
    %351 = vmatpush1.msra.mxu0 0.0
    %352 = vmatprep.subr.mxu0 0.0
    %353 = vmatpush1.msra.mxu0 0.0
    %354 = vmatprep.subr.mxu0 0.0
    %355 = vmatpush1.msra.mxu0 0.0
    %356 = vmatprep.subr.mxu0 0.0
    %357 = vmatpush1.msra.mxu0 0.0
    %358 = vmatprep.subr.mxu0 0.0
    %359 = vmatpush1.msra.mxu0 0.0
    %360 = vmatprep.subr.mxu0 0.0
    %361 = vmatpush1.msra.mxu0 0.0
    %362 = vmatprep.mubr.f32.mxu0 0.0
    %363 = vmatmul.mubr.f32.gmra.mrb[0].mxu0 %v294
    %v364 = vpop.f32.mrb[0].mxu0
    %v365 = vadd.f32 %v74, %v364
    %v366 = vpop.f32.mrb[0].mxu0
    %367 = vmatprep.mubr.f32.mxu0 0.0
    %368 = vmatmul.mubr.f32.gmra.mrb[0].mxu0 %v296
    %v369 = vpop.f32.mrb[0].mxu0
    %v370 = vadd.f32 %v75, %v369
    %v371 = vpop.f32.mrb[0].mxu0
    %372 = vdwg.mxu0
    %v373 = vsel %vm111, %v365, -inf
    %374 = vmax.xlane.f32.xlu0 %v373
    %v375 = vpop.xlane.xlu0 %374
    %v376 = vsel %vm111, %v370, -inf
    %377 = vmax.xlane.f32.xlu0 %v376
    %v378 = vpop.xlane.xlu0 %377
    %v379 = vsub.f32 %v365, %v375
    %v380 = vsub.f32 %v370, %v378
    %v381 = vmul.f32 %v379, 1.442695
    %v382 = vpow.pop %v381
    %v383 = vmul.f32 %v380, 1.442695
    %v384 = vpow.pop %v383
    %v386 = vsel %vm111, %v382, 0
    %v389 = vsel %vm111, %v384, 0
    %391 = vmatprep.subr.mxu0 0.0
    %392 = vmatpush1.msra.mxu0 %v76
    %393 = vmatprep.subr.mxu0 0.0
    %394 = vmatpush1.msra.mxu0 %v77
    %395 = vmatprep.subr.mxu0 0.0
    %396 = vmatpush1.msra.mxu0 %v78
    %397 = vmatprep.subr.mxu0 0.0
    %398 = vmatpush1.msra.mxu0 %v79
    %399 = vmatprep.subr.mxu0 0.0
    %400 = vmatpush1.msra.mxu0 %v80
    %401 = vmatprep.subr.mxu0 0.0
    %402 = vmatpush1.msra.mxu0 %v81
    %403 = vmatprep.subr.mxu0 0.0
    %404 = vmatpush1.msra.mxu0 %v82
    %405 = vmatprep.subr.mxu0 0.0
    %406 = vmatpush1.msra.mxu0 %v83
    %407 = vmatprep.subr.mxu0 0.0
    %408 = vmatpush1.msra.mxu0 0.0
    %409 = vmatprep.subr.mxu0 0.0
    %410 = vmatpush1.msra.mxu0 0.0
    %411 = vmatprep.subr.mxu0 0.0
    %412 = vmatpush1.msra.mxu0 0.0
    %413 = vmatprep.subr.mxu0 0.0
    %414 = vmatpush1.msra.mxu0 0.0
    %415 = vmatprep.subr.mxu0 0.0
    %416 = vmatpush1.msra.mxu0 0.0
    %417 = vmatprep.subr.mxu0 0.0
    %418 = vmatpush1.msra.mxu0 0.0
    %419 = vmatprep.subr.mxu0 0.0
    %420 = vmatpush1.msra.mxu0 0.0
    %421 = vmatprep.subr.mxu0 0.0
    %422 = vmatpush1.msra.mxu0 0.0
    %423 = vmatprep.subr.mxu0 0.0
    %424 = vmatpush1.msra.mxu0 0.0
    %425 = vmatprep.subr.mxu0 0.0
    %426 = vmatpush1.msra.mxu0 0.0
    %427 = vmatprep.subr.mxu0 0.0
    %428 = vmatpush1.msra.mxu0 0.0
    %429 = vmatprep.subr.mxu0 0.0
    %430 = vmatpush1.msra.mxu0 0.0
    %431 = vmatprep.subr.mxu0 0.0
    %432 = vmatpush1.msra.mxu0 0.0
    %433 = vmatprep.subr.mxu0 0.0
    %434 = vmatpush1.msra.mxu0 0.0
    %435 = vmatprep.subr.mxu0 0.0
    %436 = vmatpush1.msra.mxu0 0.0
    %437 = vmatprep.subr.mxu0 0.0
    %438 = vmatpush1.msra.mxu0 0.0
    %439 = vmatprep.subr.mxu0 0.0
    %440 = vmatpush1.msra.mxu0 0.0
    %441 = vmatprep.subr.mxu0 0.0
    %442 = vmatpush1.msra.mxu0 0.0
    %443 = vmatprep.subr.mxu0 0.0
    %444 = vmatpush1.msra.mxu0 0.0
    %445 = vmatprep.subr.mxu0 0.0
    %446 = vmatpush1.msra.mxu0 0.0
    %447 = vmatprep.subr.mxu0 0.0
    %448 = vmatpush1.msra.mxu0 0.0
    %449 = vmatprep.subr.mxu0 0.0
    %450 = vmatpush1.msra.mxu0 0.0
    %451 = vmatprep.subr.mxu0 0.0
    %452 = vmatpush1.msra.mxu0 0.0
    %453 = vmatprep.subr.mxu0 0.0
    %454 = vmatpush1.msra.mxu0 0.0
    %455 = vmatprep.mubr.f32.mxu0 0.0
    %456 = vmatmul.mubr.f32.gmra.mrb[0].mxu0 %v386
    %v457 = vpop.f32.mrb[0].mxu0
    %v458 = vadd.f32 0.0, %v457
    %v459 = vpop.f32.mrb[0].mxu0
    %460 = vmatprep.mubr.f32.mxu0 0.0
    %461 = vmatmul.mubr.f32.gmra.mrb[0].mxu0 %v389
    %v462 = vpop.f32.mrb[0].mxu0
    %v463 = vadd.f32 0.0, %v462
    %v464 = vpop.f32.mrb[0].mxu0
    %465 = vdwg.mxu0
    %v466 = vmax.f32 %v458, 1e-30
    %v467 = vmax.f32 %v463, 1e-30
    %v468 = vrcp.pop %v466
    %v469 = vrcp.pop %v467
    %470 = vrot.lane.b32.xlu0 %v185, 64
    %v471 = vpop.permute.xlu0 %470
    %472 = vrot.lane.b32.xlu0 %v191, 64
    %v473 = vpop.permute.xlu0 %472
    %v476 = vsel %vm275, %v382, 0
    %v478 = vsel %vm275, %v384, 0
    %480 = vmatprep.subr.mxu0 0.0
    %481 = vmatpush1.msra.mxu0 %v471
    %482 = vmatprep.subr.mxu0 0.0
    %483 = vmatpush1.msra.mxu0 %v473
    %484 = vmatprep.subr.mxu0 0.0
    %485 = vmatpush1.msra.mxu0 0.0
    %486 = vmatprep.subr.mxu0 0.0
    %487 = vmatpush1.msra.mxu0 0.0
    %488 = vmatprep.subr.mxu0 0.0
    %489 = vmatpush1.msra.mxu0 0.0
    %490 = vmatprep.subr.mxu0 0.0
    %491 = vmatpush1.msra.mxu0 0.0
    %492 = vmatprep.subr.mxu0 0.0
    %493 = vmatpush1.msra.mxu0 0.0
    %494 = vmatprep.subr.mxu0 0.0
    %495 = vmatpush1.msra.mxu0 0.0
    %496 = vmatprep.subr.mxu0 0.0
    %497 = vmatpush1.msra.mxu0 0.0
    %498 = vmatprep.subr.mxu0 0.0
    %499 = vmatpush1.msra.mxu0 0.0
    %500 = vmatprep.subr.mxu0 0.0
    %501 = vmatpush1.msra.mxu0 0.0
    %502 = vmatprep.subr.mxu0 0.0
    %503 = vmatpush1.msra.mxu0 0.0
    %504 = vmatprep.subr.mxu0 0.0
    %505 = vmatpush1.msra.mxu0 0.0
    %506 = vmatprep.subr.mxu0 0.0
    %507 = vmatpush1.msra.mxu0 0.0
    %508 = vmatprep.subr.mxu0 0.0
    %509 = vmatpush1.msra.mxu0 0.0
    %510 = vmatprep.subr.mxu0 0.0
    %511 = vmatpush1.msra.mxu0 0.0
    %512 = vmatprep.subr.mxu0 0.0
    %513 = vmatpush1.msra.mxu0 0.0
    %514 = vmatprep.subr.mxu0 0.0
    %515 = vmatpush1.msra.mxu0 0.0
    %516 = vmatprep.subr.mxu0 0.0
    %517 = vmatpush1.msra.mxu0 0.0
    %518 = vmatprep.subr.mxu0 0.0
    %519 = vmatpush1.msra.mxu0 0.0
    %520 = vmatprep.subr.mxu0 0.0
    %521 = vmatpush1.msra.mxu0 0.0
    %522 = vmatprep.subr.mxu0 0.0
    %523 = vmatpush1.msra.mxu0 0.0
    %524 = vmatprep.subr.mxu0 0.0
    %525 = vmatpush1.msra.mxu0 0.0
    %526 = vmatprep.subr.mxu0 0.0
    %527 = vmatpush1.msra.mxu0 0.0
    %528 = vmatprep.subr.mxu0 0.0
    %529 = vmatpush1.msra.mxu0 0.0
    %530 = vmatprep.subr.mxu0 0.0
    %531 = vmatpush1.msra.mxu0 0.0
    %532 = vmatprep.subr.mxu0 0.0
    %533 = vmatpush1.msra.mxu0 0.0
    %534 = vmatprep.subr.mxu0 0.0
    %535 = vmatpush1.msra.mxu0 0.0
    %536 = vmatprep.subr.mxu0 0.0
    %537 = vmatpush1.msra.mxu0 0.0
    %538 = vmatprep.subr.mxu0 0.0
    %539 = vmatpush1.msra.mxu0 0.0
    %540 = vmatprep.subr.mxu0 0.0
    %541 = vmatpush1.msra.mxu0 0.0
    %542 = vmatprep.subr.mxu0 0.0
    %543 = vmatpush1.msra.mxu0 0.0
    %544 = vmatprep.mubr.f32.mxu0 0.0
    %545 = vmatmul.mubr.f32.gmra.mrb[0].mxu0 %v476
    %v546 = vpop.f32.mrb[0].mxu0
    %v547 = vadd.f32 0.0, %v546
    %v548 = vpop.f32.mrb[0].mxu0
    %549 = vmatprep.mubr.f32.mxu0 0.0
    %550 = vmatmul.mubr.f32.gmra.mrb[0].mxu0 %v478
    %v551 = vpop.f32.mrb[0].mxu0
    %v552 = vadd.f32 0.0, %v551
    %v553 = vpop.f32.mrb[0].mxu0
    %554 = vdwg.mxu0
    %556 = vset.pattern.permute.xlu0 0
    %557 = vperm.xlu0 %556, %v468
    %v558 = vpop.permute.xlu0 %557
    %561 = vset.pattern.permute.xlu0 0
    %562 = vperm.xlu0 %561, %v469
    %v563 = vpop.permute.xlu0 %562
    %v565 = vmul.f32 %v547, %v558
    %v566 = vmul.f32 %v552, %v563
    %v567 = vlaneseq
    %v568 = vshrl.u32 %v567, 7
    %v569 = vsub.s32 1, %v568
    %v570 = vrot.slane %v101, %v569
    %v571 = vadd.f32 %v570, %v565
    %v572 = vadd.f32 %v570, %v566
    %573 = vrot.lane.b32.xlu0 %v382, 112
    %v574 = vpop.permute.xlu0 %573
    %575 = vrot.lane.b32.xlu0 %v384, 112
    %v576 = vpop.permute.xlu0 %575
    %577 = vrot.lane.b32.xlu0 %v185, 32
    %v578 = vpop.permute.xlu0 %577
    %579 = vrot.lane.b32.xlu0 %v191, 32
    %v580 = vpop.permute.xlu0 %579
    %v583 = vsel %vm275, %v574, 0
    %v585 = vsel %vm275, %v576, 0
    %587 = vmatprep.subr.mxu0 0.0
    %588 = vmatpush1.msra.mxu0 %v578
    %589 = vmatprep.subr.mxu0 0.0
    %590 = vmatpush1.msra.mxu0 %v580
    %591 = vmatprep.subr.mxu0 0.0
    %592 = vmatpush1.msra.mxu0 0.0
    %593 = vmatprep.subr.mxu0 0.0
    %594 = vmatpush1.msra.mxu0 0.0
    %595 = vmatprep.subr.mxu0 0.0
    %596 = vmatpush1.msra.mxu0 0.0
    %597 = vmatprep.subr.mxu0 0.0
    %598 = vmatpush1.msra.mxu0 0.0
    %599 = vmatprep.subr.mxu0 0.0
    %600 = vmatpush1.msra.mxu0 0.0
    %601 = vmatprep.subr.mxu0 0.0
    %602 = vmatpush1.msra.mxu0 0.0
    %603 = vmatprep.subr.mxu0 0.0
    %604 = vmatpush1.msra.mxu0 0.0
    %605 = vmatprep.subr.mxu0 0.0
    %606 = vmatpush1.msra.mxu0 0.0
    %607 = vmatprep.subr.mxu0 0.0
    %608 = vmatpush1.msra.mxu0 0.0
    %609 = vmatprep.subr.mxu0 0.0
    %610 = vmatpush1.msra.mxu0 0.0
    %611 = vmatprep.subr.mxu0 0.0
    %612 = vmatpush1.msra.mxu0 0.0
    %613 = vmatprep.subr.mxu0 0.0
    %614 = vmatpush1.msra.mxu0 0.0
    %615 = vmatprep.subr.mxu0 0.0
    %616 = vmatpush1.msra.mxu0 0.0
    %617 = vmatprep.subr.mxu0 0.0
    %618 = vmatpush1.msra.mxu0 0.0
    %619 = vmatprep.subr.mxu0 0.0
    %620 = vmatpush1.msra.mxu0 0.0
    %621 = vmatprep.subr.mxu0 0.0
    %622 = vmatpush1.msra.mxu0 0.0
    %623 = vmatprep.subr.mxu0 0.0
    %624 = vmatpush1.msra.mxu0 0.0
    %625 = vmatprep.subr.mxu0 0.0
    %626 = vmatpush1.msra.mxu0 0.0
    %627 = vmatprep.subr.mxu0 0.0
    %628 = vmatpush1.msra.mxu0 0.0
    %629 = vmatprep.subr.mxu0 0.0
    %630 = vmatpush1.msra.mxu0 0.0
    %631 = vmatprep.subr.mxu0 0.0
    %632 = vmatpush1.msra.mxu0 0.0
    %633 = vmatprep.subr.mxu0 0.0
    %634 = vmatpush1.msra.mxu0 0.0
    %635 = vmatprep.subr.mxu0 0.0
    %636 = vmatpush1.msra.mxu0 0.0
    %637 = vmatprep.subr.mxu0 0.0
    %638 = vmatpush1.msra.mxu0 0.0
    %639 = vmatprep.subr.mxu0 0.0
    %640 = vmatpush1.msra.mxu0 0.0
    %641 = vmatprep.subr.mxu0 0.0
    %642 = vmatpush1.msra.mxu0 0.0
    %643 = vmatprep.subr.mxu0 0.0
    %644 = vmatpush1.msra.mxu0 0.0
    %645 = vmatprep.subr.mxu0 0.0
    %646 = vmatpush1.msra.mxu0 0.0
    %647 = vmatprep.subr.mxu0 0.0
    %648 = vmatpush1.msra.mxu0 0.0
    %649 = vmatprep.subr.mxu0 0.0
    %650 = vmatpush1.msra.mxu0 0.0
    %651 = vmatprep.mubr.f32.mxu0 0.0
    %652 = vmatmul.mubr.f32.gmra.mrb[0].mxu0 %v583
    %v653 = vpop.f32.mrb[0].mxu0
    %v654 = vadd.f32 0.0, %v653
    %v655 = vpop.f32.mrb[0].mxu0
    %656 = vmatprep.mubr.f32.mxu0 0.0
    %657 = vmatmul.mubr.f32.gmra.mrb[0].mxu0 %v585
    %v658 = vpop.f32.mrb[0].mxu0
    %v659 = vadd.f32 0.0, %v658
    %v660 = vpop.f32.mrb[0].mxu0
    %661 = vdwg.mxu0
    %662 = vset.pattern.permute.xlu0 1
    %663 = vperm.xlu0 %662, %v468
    %v664 = vpop.permute.xlu0 %663
    %666 = vset.pattern.permute.xlu0 1
    %667 = vperm.xlu0 %666, %v469
    %v668 = vpop.permute.xlu0 %667
    %v670 = vmul.f32 %v654, %v664
    %v671 = vmul.f32 %v659, %v668
    %v672 = vadd.f32 %v571, %v670
    %v673 = vadd.f32 %v572, %v671
    %674 = vrot.lane.b32.xlu0 %v382, 96
    %v675 = vpop.permute.xlu0 %674
    %676 = vrot.lane.b32.xlu0 %v384, 96
    %v677 = vpop.permute.xlu0 %676
    %v678 = vsel %vm275, %v675, 0
    %v680 = vsel %vm275, %v677, 0
    %682 = vmatprep.subr.mxu0 0.0
    %683 = vmatpush1.msra.mxu0 %v187
    %684 = vmatprep.subr.mxu0 0.0
    %685 = vmatpush1.msra.mxu0 %v193
    %686 = vmatprep.subr.mxu0 0.0
    %687 = vmatpush1.msra.mxu0 0.0
    %688 = vmatprep.subr.mxu0 0.0
    %689 = vmatpush1.msra.mxu0 0.0
    %690 = vmatprep.subr.mxu0 0.0
    %691 = vmatpush1.msra.mxu0 0.0
    %692 = vmatprep.subr.mxu0 0.0
    %693 = vmatpush1.msra.mxu0 0.0
    %694 = vmatprep.subr.mxu0 0.0
    %695 = vmatpush1.msra.mxu0 0.0
    %696 = vmatprep.subr.mxu0 0.0
    %697 = vmatpush1.msra.mxu0 0.0
    %698 = vmatprep.subr.mxu0 0.0
    %699 = vmatpush1.msra.mxu0 0.0
    %700 = vmatprep.subr.mxu0 0.0
    %701 = vmatpush1.msra.mxu0 0.0
    %702 = vmatprep.subr.mxu0 0.0
    %703 = vmatpush1.msra.mxu0 0.0
    %704 = vmatprep.subr.mxu0 0.0
    %705 = vmatpush1.msra.mxu0 0.0
    %706 = vmatprep.subr.mxu0 0.0
    %707 = vmatpush1.msra.mxu0 0.0
    %708 = vmatprep.subr.mxu0 0.0
    %709 = vmatpush1.msra.mxu0 0.0
    %710 = vmatprep.subr.mxu0 0.0
    %711 = vmatpush1.msra.mxu0 0.0
    %712 = vmatprep.subr.mxu0 0.0
    %713 = vmatpush1.msra.mxu0 0.0
    %714 = vmatprep.subr.mxu0 0.0
    %715 = vmatpush1.msra.mxu0 0.0
    %716 = vmatprep.subr.mxu0 0.0
    %717 = vmatpush1.msra.mxu0 0.0
    %718 = vmatprep.subr.mxu0 0.0
    %719 = vmatpush1.msra.mxu0 0.0
    %720 = vmatprep.subr.mxu0 0.0
    %721 = vmatpush1.msra.mxu0 0.0
    %722 = vmatprep.subr.mxu0 0.0
    %723 = vmatpush1.msra.mxu0 0.0
    %724 = vmatprep.subr.mxu0 0.0
    %725 = vmatpush1.msra.mxu0 0.0
    %726 = vmatprep.subr.mxu0 0.0
    %727 = vmatpush1.msra.mxu0 0.0
    %728 = vmatprep.subr.mxu0 0.0
    %729 = vmatpush1.msra.mxu0 0.0
    %730 = vmatprep.subr.mxu0 0.0
    %731 = vmatpush1.msra.mxu0 0.0
    %732 = vmatprep.subr.mxu0 0.0
    %733 = vmatpush1.msra.mxu0 0.0
    %734 = vmatprep.subr.mxu0 0.0
    %735 = vmatpush1.msra.mxu0 0.0
    %736 = vmatprep.subr.mxu0 0.0
    %737 = vmatpush1.msra.mxu0 0.0
    %738 = vmatprep.subr.mxu0 0.0
    %739 = vmatpush1.msra.mxu0 0.0
    %740 = vmatprep.subr.mxu0 0.0
    %741 = vmatpush1.msra.mxu0 0.0
    %742 = vmatprep.subr.mxu0 0.0
    %743 = vmatpush1.msra.mxu0 0.0
    %744 = vmatprep.subr.mxu0 0.0
    %745 = vmatpush1.msra.mxu0 0.0
    %746 = vmatprep.mubr.f32.mxu0 0.0
    %747 = vmatmul.mubr.f32.gmra.mrb[0].mxu0 %v678
    %v748 = vpop.f32.mrb[0].mxu0
    %v749 = vadd.f32 0.0, %v748
    %v750 = vpop.f32.mrb[0].mxu0
    %751 = vmatprep.mubr.f32.mxu0 0.0
    %752 = vmatmul.mubr.f32.gmra.mrb[0].mxu0 %v680
    %v753 = vpop.f32.mrb[0].mxu0
    %v754 = vadd.f32 0.0, %v753
    %v755 = vpop.f32.mrb[0].mxu0
    %756 = vdwg.mxu0
    %757 = vset.pattern.permute.xlu0 2
    %758 = vperm.xlu0 %757, %v468
    %v759 = vpop.permute.xlu0 %758
    %761 = vset.pattern.permute.xlu0 2
    %762 = vperm.xlu0 %761, %v469
    %v763 = vpop.permute.xlu0 %762
    %v765 = vmul.f32 %v749, %v759
    %v766 = vmul.f32 %v754, %v763
    %v767 = vadd.f32 %v672, %v765
    %v768 = vadd.f32 %v673, %v766
    %769 = vrot.lane.b32.xlu0 %v382, 80
    %v770 = vpop.permute.xlu0 %769
    %771 = vrot.lane.b32.xlu0 %v384, 80
    %v772 = vpop.permute.xlu0 %771
    %775 = vrot.lane.b32.xlu0 %v187, 96
    %v776 = vpop.permute.xlu0 %775
    %777 = vrot.lane.b32.xlu0 %v193, 96
    %v778 = vpop.permute.xlu0 %777
    %v781 = vsel %vm275, %v770, 0
    %v783 = vsel %vm275, %v772, 0
    %785 = vmatprep.subr.mxu0 0.0
    %786 = vmatpush1.msra.mxu0 %v776
    %787 = vmatprep.subr.mxu0 0.0
    %788 = vmatpush1.msra.mxu0 %v778
    %789 = vmatprep.subr.mxu0 0.0
    %790 = vmatpush1.msra.mxu0 0.0
    %791 = vmatprep.subr.mxu0 0.0
    %792 = vmatpush1.msra.mxu0 0.0
    %793 = vmatprep.subr.mxu0 0.0
    %794 = vmatpush1.msra.mxu0 0.0
    %795 = vmatprep.subr.mxu0 0.0
    %796 = vmatpush1.msra.mxu0 0.0
    %797 = vmatprep.subr.mxu0 0.0
    %798 = vmatpush1.msra.mxu0 0.0
    %799 = vmatprep.subr.mxu0 0.0
    %800 = vmatpush1.msra.mxu0 0.0
    %801 = vmatprep.subr.mxu0 0.0
    %802 = vmatpush1.msra.mxu0 0.0
    %803 = vmatprep.subr.mxu0 0.0
    %804 = vmatpush1.msra.mxu0 0.0
    %805 = vmatprep.subr.mxu0 0.0
    %806 = vmatpush1.msra.mxu0 0.0
    %807 = vmatprep.subr.mxu0 0.0
    %808 = vmatpush1.msra.mxu0 0.0
    %809 = vmatprep.subr.mxu0 0.0
    %810 = vmatpush1.msra.mxu0 0.0
    %811 = vmatprep.subr.mxu0 0.0
    %812 = vmatpush1.msra.mxu0 0.0
    %813 = vmatprep.subr.mxu0 0.0
    %814 = vmatpush1.msra.mxu0 0.0
    %815 = vmatprep.subr.mxu0 0.0
    %816 = vmatpush1.msra.mxu0 0.0
    %817 = vmatprep.subr.mxu0 0.0
    %818 = vmatpush1.msra.mxu0 0.0
    %819 = vmatprep.subr.mxu0 0.0
    %820 = vmatpush1.msra.mxu0 0.0
    %821 = vmatprep.subr.mxu0 0.0
    %822 = vmatpush1.msra.mxu0 0.0
    %823 = vmatprep.subr.mxu0 0.0
    %824 = vmatpush1.msra.mxu0 0.0
    %825 = vmatprep.subr.mxu0 0.0
    %826 = vmatpush1.msra.mxu0 0.0
    %827 = vmatprep.subr.mxu0 0.0
    %828 = vmatpush1.msra.mxu0 0.0
    %829 = vmatprep.subr.mxu0 0.0
    %830 = vmatpush1.msra.mxu0 0.0
    %831 = vmatprep.subr.mxu0 0.0
    %832 = vmatpush1.msra.mxu0 0.0
    %833 = vmatprep.subr.mxu0 0.0
    %834 = vmatpush1.msra.mxu0 0.0
    %835 = vmatprep.subr.mxu0 0.0
    %836 = vmatpush1.msra.mxu0 0.0
    %837 = vmatprep.subr.mxu0 0.0
    %838 = vmatpush1.msra.mxu0 0.0
    %839 = vmatprep.subr.mxu0 0.0
    %840 = vmatpush1.msra.mxu0 0.0
    %841 = vmatprep.subr.mxu0 0.0
    %842 = vmatpush1.msra.mxu0 0.0
    %843 = vmatprep.subr.mxu0 0.0
    %844 = vmatpush1.msra.mxu0 0.0
    %845 = vmatprep.subr.mxu0 0.0
    %846 = vmatpush1.msra.mxu0 0.0
    %847 = vmatprep.subr.mxu0 0.0
    %848 = vmatpush1.msra.mxu0 0.0
    %849 = vmatprep.mubr.f32.mxu0 0.0
    %850 = vmatmul.mubr.f32.gmra.mrb[0].mxu0 %v781
    %v851 = vpop.f32.mrb[0].mxu0
    %v852 = vadd.f32 0.0, %v851
    %v853 = vpop.f32.mrb[0].mxu0
    %854 = vmatprep.mubr.f32.mxu0 0.0
    %855 = vmatmul.mubr.f32.gmra.mrb[0].mxu0 %v783
    %v856 = vpop.f32.mrb[0].mxu0
    %v857 = vadd.f32 0.0, %v856
    %v858 = vpop.f32.mrb[0].mxu0
    %859 = vdwg.mxu0
    %860 = vset.pattern.permute.xlu0 3
    %861 = vperm.xlu0 %860, %v468
    %v862 = vpop.permute.xlu0 %861
    %864 = vset.pattern.permute.xlu0 3
    %865 = vperm.xlu0 %864, %v469
    %v866 = vpop.permute.xlu0 %865
    %v868 = vmul.f32 %v852, %v862
    %v869 = vmul.f32 %v857, %v866
    %v870 = vadd.f32 %v767, %v868
    %v871 = vadd.f32 %v768, %v869
    %872 = vmatprep.subr.mxu0 0.0
    %873 = vmatpush1.msra.mxu0 %v42
    %874 = vmatprep.subr.mxu0 0.0
    %875 = vmatpush1.msra.mxu0 %v43
    %876 = vmatprep.subr.mxu0 0.0
    %877 = vmatpush1.msra.mxu0 %v44
    %878 = vmatprep.subr.mxu0 0.0
    %879 = vmatpush1.msra.mxu0 %v45
    %880 = vmatprep.subr.mxu0 0.0
    %881 = vmatpush1.msra.mxu0 %v46
    %882 = vmatprep.subr.mxu0 0.0
    %883 = vmatpush1.msra.mxu0 %v47
    %884 = vmatprep.subr.mxu0 0.0
    %885 = vmatpush1.msra.mxu0 %v48
    %886 = vmatprep.subr.mxu0 0.0
    %887 = vmatpush1.msra.mxu0 %v49
    %888 = vmatprep.subr.mxu0 0.0
    %889 = vmatpush1.msra.mxu0 0.0
    %890 = vmatprep.subr.mxu0 0.0
    %891 = vmatpush1.msra.mxu0 0.0
    %892 = vmatprep.subr.mxu0 0.0
    %893 = vmatpush1.msra.mxu0 0.0
    %894 = vmatprep.subr.mxu0 0.0
    %895 = vmatpush1.msra.mxu0 0.0
    %896 = vmatprep.subr.mxu0 0.0
    %897 = vmatpush1.msra.mxu0 0.0
    %898 = vmatprep.subr.mxu0 0.0
    %899 = vmatpush1.msra.mxu0 0.0
    %900 = vmatprep.subr.mxu0 0.0
    %901 = vmatpush1.msra.mxu0 0.0
    %902 = vmatprep.subr.mxu0 0.0
    %903 = vmatpush1.msra.mxu0 0.0
    %904 = vmatprep.subr.mxu0 0.0
    %905 = vmatpush1.msra.mxu0 0.0
    %906 = vmatprep.subr.mxu0 0.0
    %907 = vmatpush1.msra.mxu0 0.0
    %908 = vmatprep.subr.mxu0 0.0
    %909 = vmatpush1.msra.mxu0 0.0
    %910 = vmatprep.subr.mxu0 0.0
    %911 = vmatpush1.msra.mxu0 0.0
    %912 = vmatprep.subr.mxu0 0.0
    %913 = vmatpush1.msra.mxu0 0.0
    %914 = vmatprep.subr.mxu0 0.0
    %915 = vmatpush1.msra.mxu0 0.0
    %916 = vmatprep.subr.mxu0 0.0
    %917 = vmatpush1.msra.mxu0 0.0
    %918 = vmatprep.subr.mxu0 0.0
    %919 = vmatpush1.msra.mxu0 0.0
    %920 = vmatprep.subr.mxu0 0.0
    %921 = vmatpush1.msra.mxu0 0.0
    %922 = vmatprep.subr.mxu0 0.0
    %923 = vmatpush1.msra.mxu0 0.0
    %924 = vmatprep.subr.mxu0 0.0
    %925 = vmatpush1.msra.mxu0 0.0
    %926 = vmatprep.subr.mxu0 0.0
    %927 = vmatpush1.msra.mxu0 0.0
    %928 = vmatprep.subr.mxu0 0.0
    %929 = vmatpush1.msra.mxu0 0.0
    %930 = vmatprep.subr.mxu0 0.0
    %931 = vmatpush1.msra.mxu0 0.0
    %932 = vmatprep.subr.mxu0 0.0
    %933 = vmatpush1.msra.mxu0 0.0
    %934 = vmatprep.subr.mxu0 0.0
    %935 = vmatpush1.msra.mxu0 0.0
    %936 = vmatprep.mubr.f32.mxu0 0.0
    %937 = vmatmul.mubr.f32.gmra.mrb[0].mxu0 %v113
    %v938 = vpop.f32.mrb[0].mxu0
    %v939 = vadd.f32 %v870, %v938
    %v940 = vpop.f32.mrb[0].mxu0
    %941 = vmatprep.mubr.f32.mxu0 0.0
    %942 = vmatmul.mubr.f32.gmra.mrb[0].mxu0 %v116
    %v943 = vpop.f32.mrb[0].mxu0
    %v944 = vadd.f32 %v871, %v943
    %v945 = vpop.f32.mrb[0].mxu0
    %946 = vdwg.mxu0
    %v947 = vsel %vm280, %v939, 0.0
    %948 = vadd.xlane.f32.xlu0 %v947
    %v949 = vpop.xlane.xlu0 %948
    %v950 = vsel %vm280, %v944, 0.0
    %951 = vadd.xlane.f32.xlu0 %v950
    %v952 = vpop.xlane.xlu0 %951
    %v953 = vmul.f32 %v939, %v939
    %v954 = vmul.f32 %v944, %v944
    %v955 = vsel %vm280, %v953, 0.0
    %956 = vadd.xlane.f32.xlu0 %v955
    %v957 = vpop.xlane.xlu0 %956
    %v958 = vsel %vm280, %v954, 0.0
    %959 = vadd.xlane.f32.xlu0 %v958
    %v960 = vpop.xlane.xlu0 %959
    %v961 = vmul.f32 %v949, 0.03125
    %v962 = vmul.f32 %v952, 0.03125
    %v963 = vmul.f32 %v957, 0.03125
    %v964 = vmul.f32 %v960, 0.03125
    %v965 = vmul.f32 %v961, %v961
    %v966 = vmul.f32 %v962, %v962
    %v967 = vsub.f32 %v963, %v965
    %v968 = vsub.f32 %v964, %v966
    %v969 = vmax.f32 %v967, 0.0
    %v970 = vmax.f32 %v968, 0.0
    %v971 = vsub.f32 %v939, %v961
    %v972 = vsub.f32 %v944, %v962
    %v973 = vadd.f32 %v969, 1e-05
    %v974 = vadd.f32 %v970, 1e-05
    %v975 = vrsqrt.pop %v973
    %v976 = vrsqrt.pop %v974
    %v977 = vmul.f32 %v971, %v975
    %v978 = vmul.f32 %v972, %v976
    %v979 = vlaneseq
    %v980 = vshrl.u32 %v979, 7
    %v981 = vsub.s32 2, %v980
    %v982 = vrot.slane %v101, %v981
    %v983 = vmul.f32 %v977, %v982
    %v984 = vmul.f32 %v978, %v982
    %v985 = vlaneseq
    %v986 = vshrl.u32 %v985, 7
    %v987 = vsub.s32 3, %v986
    %v988 = vrot.slane %v101, %v987
    %v989 = vadd.f32 %v983, %v988
    %v990 = vadd.f32 %v984, %v988
    %v991 = vld [vmem:[#allocation2 + $0xc0] sm:$0xff]
    %v992 = vld [vmem:[#allocation2 + $0xd0] sm:$0xff]
    %v993 = vld [vmem:[#allocation2 + $0xe0] sm:$0xff]
    %v994 = vld [vmem:[#allocation2 + $0xf0] sm:$0xff]
    %v995 = vld [vmem:[#allocation2 + $0x40] sm:$0xff]
    %v996 = vld [vmem:[#allocation2 + $0x50] sm:$0xff]
    %v997 = vld [vmem:[#allocation2 + $0x60] sm:$0xff]
    %v998 = vld [vmem:[#allocation2 + $0x70] sm:$0xff]
    %v999 = vld [vmem:[#allocation2 + $0x80] sm:$0xff]
    %v1000 = vld [vmem:[#allocation2 + $0x90] sm:$0xff]
    %v1001 = vld [vmem:[#allocation2 + $0xa0] sm:$0xff]
    %v1002 = vld [vmem:[#allocation2 + $0xb0] sm:$0xff]
    %v1003 = vlaneseq
    %v1004 = vshrl.u32 %v1003, 7
    %v1005 = vsub.s32 4, %v1004
    %v1006 = vrot.slane %v101, %v1005
    %v1008 = vsel %vm280, %v989, 0
    %v1011 = vsel %vm280, %v990, 0
    %1013 = vmatprep.subr.mxu0 0.0
    %1014 = vmatpush1.msra.mxu0 %v991
    %1015 = vmatprep.subr.mxu0 0.0
    %1016 = vmatpush1.msra.mxu0 %v992
    %1017 = vmatprep.subr.mxu0 0.0
    %1018 = vmatpush1.msra.mxu0 %v993
    %1019 = vmatprep.subr.mxu0 0.0
    %1020 = vmatpush1.msra.mxu0 %v994
    %1021 = vmatprep.subr.mxu0 0.0
    %1022 = vmatpush1.msra.mxu0 0.0
    %1023 = vmatprep.subr.mxu0 0.0
    %1024 = vmatpush1.msra.mxu0 0.0
    %1025 = vmatprep.subr.mxu0 0.0
    %1026 = vmatpush1.msra.mxu0 0.0
    %1027 = vmatprep.subr.mxu0 0.0
    %1028 = vmatpush1.msra.mxu0 0.0
    %1029 = vmatprep.subr.mxu0 0.0
    %1030 = vmatpush1.msra.mxu0 0.0
    %1031 = vmatprep.subr.mxu0 0.0
    %1032 = vmatpush1.msra.mxu0 0.0
    %1033 = vmatprep.subr.mxu0 0.0
    %1034 = vmatpush1.msra.mxu0 0.0
    %1035 = vmatprep.subr.mxu0 0.0
    %1036 = vmatpush1.msra.mxu0 0.0
    %1037 = vmatprep.subr.mxu0 0.0
    %1038 = vmatpush1.msra.mxu0 0.0
    %1039 = vmatprep.subr.mxu0 0.0
    %1040 = vmatpush1.msra.mxu0 0.0
    %1041 = vmatprep.subr.mxu0 0.0
    %1042 = vmatpush1.msra.mxu0 0.0
    %1043 = vmatprep.subr.mxu0 0.0
    %1044 = vmatpush1.msra.mxu0 0.0
    %1045 = vmatprep.subr.mxu0 0.0
    %1046 = vmatpush1.msra.mxu0 0.0
    %1047 = vmatprep.subr.mxu0 0.0
    %1048 = vmatpush1.msra.mxu0 0.0
    %1049 = vmatprep.subr.mxu0 0.0
    %1050 = vmatpush1.msra.mxu0 0.0
    %1051 = vmatprep.subr.mxu0 0.0
    %1052 = vmatpush1.msra.mxu0 0.0
    %1053 = vmatprep.subr.mxu0 0.0
    %1054 = vmatpush1.msra.mxu0 0.0
    %1055 = vmatprep.subr.mxu0 0.0
    %1056 = vmatpush1.msra.mxu0 0.0
    %1057 = vmatprep.subr.mxu0 0.0
    %1058 = vmatpush1.msra.mxu0 0.0
    %1059 = vmatprep.subr.mxu0 0.0
    %1060 = vmatpush1.msra.mxu0 0.0
    %1061 = vmatprep.subr.mxu0 0.0
    %1062 = vmatpush1.msra.mxu0 0.0
    %1063 = vmatprep.subr.mxu0 0.0
    %1064 = vmatpush1.msra.mxu0 0.0
    %1065 = vmatprep.subr.mxu0 0.0
    %1066 = vmatpush1.msra.mxu0 0.0
    %1067 = vmatprep.subr.mxu0 0.0
    %1068 = vmatpush1.msra.mxu0 0.0
    %1069 = vmatprep.subr.mxu0 0.0
    %1070 = vmatpush1.msra.mxu0 0.0
    %1071 = vmatprep.subr.mxu0 0.0
    %1072 = vmatpush1.msra.mxu0 0.0
    %1073 = vmatprep.subr.mxu0 0.0
    %1074 = vmatpush1.msra.mxu0 0.0
    %1075 = vmatprep.subr.mxu0 0.0
    %1076 = vmatpush1.msra.mxu0 0.0
    %1077 = vmatprep.mubr.f32.mxu0 0.0
    %1078 = vmatmul.mubr.f32.gmra.mrb[0].mxu0 %v1008
    %v1079 = vpop.f32.mrb[0].mxu0
    %v1080 = vadd.f32 %v1006, %v1079
    %v1081 = vpop.f32.mrb[0].mxu0
    %1082 = vmatprep.mubr.f32.mxu0 0.0
    %1083 = vmatmul.mubr.f32.gmra.mrb[0].mxu0 %v1011
    %v1084 = vpop.f32.mrb[0].mxu0
    %v1085 = vadd.f32 %v1006, %v1084
    %v1086 = vpop.f32.mrb[0].mxu0
    %1087 = vdwg.mxu0
    %v1088 = vmax.f32 %v1080, 0.0
    %v1089 = vmax.f32 %v1085, 0.0
    %v1090 = vlaneseq
    %v1091 = vshrl.u32 %v1090, 7
    %v1092 = vsub.s32 5, %v1091
    %v1093 = vrot.slane %v101, %v1092
    %v1095 = vsel %vm111, %v1088, 0
    %v1098 = vsel %vm111, %v1089, 0
    %1100 = vmatprep.subr.mxu0 0.0
    %1101 = vmatpush1.msra.mxu0 %v995
    %1102 = vmatprep.subr.mxu0 0.0
    %1103 = vmatpush1.msra.mxu0 %v996
    %1104 = vmatprep.subr.mxu0 0.0
    %1105 = vmatpush1.msra.mxu0 %v997
    %1106 = vmatprep.subr.mxu0 0.0
    %1107 = vmatpush1.msra.mxu0 %v998
    %1108 = vmatprep.subr.mxu0 0.0
    %1109 = vmatpush1.msra.mxu0 %v999
    %1110 = vmatprep.subr.mxu0 0.0
    %1111 = vmatpush1.msra.mxu0 %v1000
    %1112 = vmatprep.subr.mxu0 0.0
    %1113 = vmatpush1.msra.mxu0 %v1001
    %1114 = vmatprep.subr.mxu0 0.0
    %1115 = vmatpush1.msra.mxu0 %v1002
    %1116 = vmatprep.subr.mxu0 0.0
    %1117 = vmatpush1.msra.mxu0 0.0
    %1118 = vmatprep.subr.mxu0 0.0
    %1119 = vmatpush1.msra.mxu0 0.0
    %1120 = vmatprep.subr.mxu0 0.0
    %1121 = vmatpush1.msra.mxu0 0.0
    %1122 = vmatprep.subr.mxu0 0.0
    %1123 = vmatpush1.msra.mxu0 0.0
    %1124 = vmatprep.subr.mxu0 0.0
    %1125 = vmatpush1.msra.mxu0 0.0
    %1126 = vmatprep.subr.mxu0 0.0
    %1127 = vmatpush1.msra.mxu0 0.0
    %1128 = vmatprep.subr.mxu0 0.0
    %1129 = vmatpush1.msra.mxu0 0.0
    %1130 = vmatprep.subr.mxu0 0.0
    %1131 = vmatpush1.msra.mxu0 0.0
    %1132 = vmatprep.subr.mxu0 0.0
    %1133 = vmatpush1.msra.mxu0 0.0
    %1134 = vmatprep.subr.mxu0 0.0
    %1135 = vmatpush1.msra.mxu0 0.0
    %1136 = vmatprep.subr.mxu0 0.0
    %1137 = vmatpush1.msra.mxu0 0.0
    %1138 = vmatprep.subr.mxu0 0.0
    %1139 = vmatpush1.msra.mxu0 0.0
    %1140 = vmatprep.subr.mxu0 0.0
    %1141 = vmatpush1.msra.mxu0 0.0
    %1142 = vmatprep.subr.mxu0 0.0
    %1143 = vmatpush1.msra.mxu0 0.0
    %1144 = vmatprep.subr.mxu0 0.0
    %1145 = vmatpush1.msra.mxu0 0.0
    %1146 = vmatprep.subr.mxu0 0.0
    %1147 = vmatpush1.msra.mxu0 0.0
    %1148 = vmatprep.subr.mxu0 0.0
    %1149 = vmatpush1.msra.mxu0 0.0
    %1150 = vmatprep.subr.mxu0 0.0
    %1151 = vmatpush1.msra.mxu0 0.0
    %1152 = vmatprep.subr.mxu0 0.0
    %1153 = vmatpush1.msra.mxu0 0.0
    %1154 = vmatprep.subr.mxu0 0.0
    %1155 = vmatpush1.msra.mxu0 0.0
    %1156 = vmatprep.subr.mxu0 0.0
    %1157 = vmatpush1.msra.mxu0 0.0
    %1158 = vmatprep.subr.mxu0 0.0
    %1159 = vmatpush1.msra.mxu0 0.0
    %1160 = vmatprep.subr.mxu0 0.0
    %1161 = vmatpush1.msra.mxu0 0.0
    %1162 = vmatprep.subr.mxu0 0.0
    %1163 = vmatpush1.msra.mxu0 0.0
    %1164 = vmatprep.mubr.f32.mxu0 0.0
    %1165 = vmatmul.mubr.f32.gmra.mrb[0].mxu0 %v1095
    %v1166 = vpop.f32.mrb[0].mxu0
    %v1167 = vadd.f32 %v1093, %v1166
    %v1168 = vpop.f32.mrb[0].mxu0
    %1169 = vmatprep.mubr.f32.mxu0 0.0
    %1170 = vmatmul.mubr.f32.gmra.mrb[0].mxu0 %v1098
    %v1171 = vpop.f32.mrb[0].mxu0
    %v1172 = vadd.f32 %v1093, %v1171
    %v1173 = vpop.f32.mrb[0].mxu0
    %1174 = vdwg.mxu0
    %v1175 = vadd.f32 %v989, %v1167
    %v1176 = vadd.f32 %v990, %v1172
    %v1177 = vsel %vm280, %v1175, 0.0
    %1178 = vadd.xlane.f32.xlu0 %v1177
    %v1179 = vpop.xlane.xlu0 %1178
    %v1180 = vsel %vm280, %v1176, 0.0
    %1181 = vadd.xlane.f32.xlu0 %v1180
    %v1182 = vpop.xlane.xlu0 %1181
    %v1183 = vmul.f32 %v1175, %v1175
    %v1184 = vmul.f32 %v1176, %v1176
    %v1185 = vsel %vm280, %v1183, 0.0
    %1186 = vadd.xlane.f32.xlu0 %v1185
    %v1187 = vpop.xlane.xlu0 %1186
    %v1188 = vsel %vm280, %v1184, 0.0
    %1189 = vadd.xlane.f32.xlu0 %v1188
    %v1190 = vpop.xlane.xlu0 %1189
    %v1191 = vmul.f32 %v1179, 0.03125
    %v1192 = vmul.f32 %v1182, 0.03125
    %v1193 = vmul.f32 %v1187, 0.03125
    %v1194 = vmul.f32 %v1190, 0.03125
    %v1195 = vmul.f32 %v1191, %v1191
    %v1196 = vmul.f32 %v1192, %v1192
    %v1197 = vsub.f32 %v1193, %v1195
    %v1198 = vsub.f32 %v1194, %v1196
    %v1199 = vmax.f32 %v1197, 0.0
    %v1200 = vmax.f32 %v1198, 0.0
    %v1201 = vsub.f32 %v1175, %v1191
    %v1202 = vsub.f32 %v1176, %v1192
    %v1203 = vadd.f32 %v1199, 1e-05
    %v1204 = vadd.f32 %v1200, 1e-05
    %v1205 = vrsqrt.pop %v1203
    %v1206 = vrsqrt.pop %v1204
    %v1207 = vmul.f32 %v1201, %v1205
    %v1208 = vmul.f32 %v1202, %v1206
    %v1209 = vlaneseq
    %v1210 = vshrl.u32 %v1209, 7
    %v1211 = vsub.s32 6, %v1210
    %v1212 = vrot.slane %v101, %v1211
    %v1213 = vmul.f32 %v1207, %v1212
    %v1214 = vmul.f32 %v1208, %v1212
    %v1215 = vlaneseq
    %v1216 = vshrl.u32 %v1215, 7
    %v1217 = vsub.s32 7, %v1216
    %v1218 = vrot.slane %v101, %v1217
    %v1219 = vadd.f32 %v1213, %v1218
    %v1220 = vadd.f32 %v1214, %v1218
    %s1221 = scalar_lea.vmem [#allocation2], 272
    %v1222 = vld [vmem:[%s1221 + $0x100] sm:$0xff]
    %v1223 = vld [vmem:[%s1221 + $0x108] sm:$0xff]
    %v1224 = vld [vmem:[%s1221] sm:$0xff]
    %v1225 = vld [vmem:[%s1221 + $0x8] sm:$0xff]
    %v1226 = vld [vmem:[%s1221 + $0x10] sm:$0xff]
    %v1227 = vld [vmem:[%s1221 + $0x18] sm:$0xff]
    %v1228 = vld [vmem:[%s1221 + $0x20] sm:$0xff]
    %v1229 = vld [vmem:[%s1221 + $0x28] sm:$0xff]
    %v1230 = vld [vmem:[%s1221 + $0x30] sm:$0xff]
    %v1231 = vld [vmem:[%s1221 + $0x38] sm:$0xff]
    %v1232 = vlaneseq
    %v1233 = vshrl.u32 %v1232, 7
    %v1234 = vsub.s32 0, %v1233
    %v1235 = vrot.slane %v1222, %v1234
    %v1236 = vlaneseq
    %v1237 = vshrl.u32 %v1236, 7
    %v1238 = vsub.s32 0, %v1237
    %v1239 = vrot.slane %v1223, %v1238
    %v1241 = vsel %vm280, %v1219, 0
    %v1244 = vsel %vm280, %v1220, 0
    %1246 = vmatprep.subr.mxu0 %v1225
    %1247 = vmatpush1.msra.mxu0 %v1224
    %1248 = vmatprep.subr.mxu0 %v1227
    %1249 = vmatpush1.msra.mxu0 %v1226
    %1250 = vmatprep.subr.mxu0 %v1229
    %1251 = vmatpush1.msra.mxu0 %v1228
    %1252 = vmatprep.subr.mxu0 %v1231
    %1253 = vmatpush1.msra.mxu0 %v1230
    %1254 = vmatprep.subr.mxu0 0.0
    %1255 = vmatpush1.msra.mxu0 0.0
    %1256 = vmatprep.subr.mxu0 0.0
    %1257 = vmatpush1.msra.mxu0 0.0
    %1258 = vmatprep.subr.mxu0 0.0
    %1259 = vmatpush1.msra.mxu0 0.0
    %1260 = vmatprep.subr.mxu0 0.0
    %1261 = vmatpush1.msra.mxu0 0.0
    %1262 = vmatprep.subr.mxu0 0.0
    %1263 = vmatpush1.msra.mxu0 0.0
    %1264 = vmatprep.subr.mxu0 0.0
    %1265 = vmatpush1.msra.mxu0 0.0
    %1266 = vmatprep.subr.mxu0 0.0
    %1267 = vmatpush1.msra.mxu0 0.0
    %1268 = vmatprep.subr.mxu0 0.0
    %1269 = vmatpush1.msra.mxu0 0.0
    %1270 = vmatprep.subr.mxu0 0.0
    %1271 = vmatpush1.msra.mxu0 0.0
    %1272 = vmatprep.subr.mxu0 0.0
    %1273 = vmatpush1.msra.mxu0 0.0
    %1274 = vmatprep.subr.mxu0 0.0
    %1275 = vmatpush1.msra.mxu0 0.0
    %1276 = vmatprep.subr.mxu0 0.0
    %1277 = vmatpush1.msra.mxu0 0.0
    %1278 = vmatprep.subr.mxu0 0.0
    %1279 = vmatpush1.msra.mxu0 0.0
    %1280 = vmatprep.subr.mxu0 0.0
    %1281 = vmatpush1.msra.mxu0 0.0
    %1282 = vmatprep.subr.mxu0 0.0
    %1283 = vmatpush1.msra.mxu0 0.0
    %1284 = vmatprep.subr.mxu0 0.0
    %1285 = vmatpush1.msra.mxu0 0.0
    %1286 = vmatprep.subr.mxu0 0.0
    %1287 = vmatpush1.msra.mxu0 0.0
    %1288 = vmatprep.subr.mxu0 0.0
    %1289 = vmatpush1.msra.mxu0 0.0
    %1290 = vmatprep.subr.mxu0 0.0
    %1291 = vmatpush1.msra.mxu0 0.0
    %1292 = vmatprep.subr.mxu0 0.0
    %1293 = vmatpush1.msra.mxu0 0.0
    %1294 = vmatprep.subr.mxu0 0.0
    %1295 = vmatpush1.msra.mxu0 0.0
    %1296 = vmatprep.subr.mxu0 0.0
    %1297 = vmatpush1.msra.mxu0 0.0
    %1298 = vmatprep.subr.mxu0 0.0
    %1299 = vmatpush1.msra.mxu0 0.0
    %1300 = vmatprep.subr.mxu0 0.0
    %1301 = vmatpush1.msra.mxu0 0.0
    %1302 = vmatprep.subr.mxu0 0.0
    %1303 = vmatpush1.msra.mxu0 0.0
    %1304 = vmatprep.subr.mxu0 0.0
    %1305 = vmatpush1.msra.mxu0 0.0
    %1306 = vmatprep.subr.mxu0 0.0
    %1307 = vmatpush1.msra.mxu0 0.0
    %1308 = vmatprep.subr.mxu0 0.0
    %1309 = vmatpush1.msra.mxu0 0.0
    %1310 = vmatprep.mubr.f32.mxu0 0.0
    %1311 = vmatmul.mubr.f32.gmra.mrb[0].mxu0 %v1241
    %v1312 = vpop.f32.mrb[0].mxu0
    %v1313 = vadd.f32 %v1235, %v1312
    %v1314 = vpop.f32.mrb[0].mxu0
    %v1315 = vadd.f32 %v1239, %v1314
    %1316 = vmatprep.mubr.f32.mxu0 0.0
    %1317 = vmatmul.mubr.f32.gmra.mrb[0].mxu0 %v1244
    %v1318 = vpop.f32.mrb[0].mxu0
    %v1319 = vadd.f32 %v1235, %v1318
    %v1320 = vpop.f32.mrb[0].mxu0
    %v1321 = vadd.f32 %v1239, %v1320
    %1322 = vdwg.mxu0
    %1325 = vrot.lane.b32.xlu0 %v1313, 96
    %v1326 = vpop.permute.xlu0 %1325
    %1327 = vrot.lane.b32.xlu0 %v1319, 96
    %v1328 = vpop.permute.xlu0 %1327
    %1331 = vxpose.xlu0.b32.start [1/16] %v1326, 128
    %1332 = vxpose.xlu0.b32.cont [2/16] %v1328, 128
    %1333 = vxpose.xlu0.b32.cont [3/16] 0.0, 128
    %1334 = vxpose.xlu0.b32.cont [4/16] 0.0, 128
    %1335 = vxpose.xlu0.b32.cont [5/16] 0.0, 128
    %1336 = vxpose.xlu0.b32.cont [6/16] 0.0, 128
    %1337 = vxpose.xlu0.b32.cont [7/16] 0.0, 128
    %1338 = vxpose.xlu0.b32.cont [8/16] 0.0, 128
    %1339 = vxpose.xlu0.b32.cont [9/16] 0.0, 128
    %1340 = vxpose.xlu0.b32.cont [10/16] 0.0, 128
    %1341 = vxpose.xlu0.b32.cont [11/16] 0.0, 128
    %1342 = vxpose.xlu0.b32.cont [12/16] 0.0, 128
    %1343 = vxpose.xlu0.b32.cont [13/16] 0.0, 128
    %1344 = vxpose.xlu0.b32.cont [14/16] 0.0, 128
    %1345 = vxpose.xlu0.b32.cont [15/16] 0.0, 128
    %1346 = vxpose.xlu0.b32.end [16/16] 0.0, 128
    %v1347 = vpop.trf.xlu0
    %v1348 = vpop.trf.xlu0
    %v1349 = vpop.trf.xlu0
    %v1350 = vpop.trf.xlu0
    %v1351 = vpop.trf.xlu0
    %v1352 = vpop.trf.xlu0
    %v1353 = vpop.trf.xlu0
    %v1354 = vpop.trf.xlu0
    %v1355 = vpop.trf.xlu0
    %v1356 = vpop.trf.xlu0
    %v1357 = vpop.trf.xlu0
    %v1358 = vpop.trf.xlu0
    %v1359 = vpop.trf.xlu0
    %v1360 = vpop.trf.xlu0
    %v1361 = vpop.trf.xlu0
    %v1362 = vpop.trf.xlu0
    %1367 = vrot.lane.b32.xlu0 %v1347, 16
    %v1368 = vpop.permute.xlu0 %1367
    %1369 = vrot.lane.b32.xlu0 %v1348, 16
    %v1370 = vpop.permute.xlu0 %1369
    %1371 = vrot.lane.b32.xlu0 %v1349, 16
    %v1372 = vpop.permute.xlu0 %1371
    %1373 = vrot.lane.b32.xlu0 %v1350, 16
    %v1374 = vpop.permute.xlu0 %1373
    %1379 = vrot.lane.b32.xlu0 %v1347, 32
    %v1380 = vpop.permute.xlu0 %1379
    %1381 = vrot.lane.b32.xlu0 %v1348, 32
    %v1382 = vpop.permute.xlu0 %1381
    %1383 = vrot.lane.b32.xlu0 %v1349, 32
    %v1384 = vpop.permute.xlu0 %1383
    %1385 = vrot.lane.b32.xlu0 %v1350, 32
    %v1386 = vpop.permute.xlu0 %1385
    %1391 = vrot.lane.b32.xlu0 %v1347, 48
    %v1392 = vpop.permute.xlu0 %1391
    %1393 = vrot.lane.b32.xlu0 %v1348, 48
    %v1394 = vpop.permute.xlu0 %1393
    %1395 = vrot.lane.b32.xlu0 %v1349, 48
    %v1396 = vpop.permute.xlu0 %1395
    %1397 = vrot.lane.b32.xlu0 %v1350, 48
    %v1398 = vpop.permute.xlu0 %1397
    %v1403 = vsel %vm275, %v1347, %v1368
    %v1404 = vsel %vm275, %v1348, %v1370
    %v1405 = vsel %vm275, %v1349, %v1372
    %v1406 = vsel %vm275, %v1350, %v1374
    %v1407 = vsel %vm280, %v1403, %v1380
    %v1408 = vsel %vm280, %v1404, %v1382
    %v1409 = vsel %vm280, %v1405, %v1384
    %v1410 = vsel %vm280, %v1406, %v1386
    %v1411 = vsel %vm285, %v1407, %v1392
    %v1412 = vsel %vm285, %v1408, %v1394
    %v1413 = vsel %vm285, %v1409, %v1396
    %v1414 = vsel %vm285, %v1410, %v1398
    %v1415 = vmul.f32 %v1411, %v70
    %v1416 = vmul.f32 %v1412, %v71
    %v1417 = vmul.f32 %v1413, %v72
    %v1418 = vmul.f32 %v1414, %v73
    %v1419 = vsel %vm280, %v1313, 0
    %v1421 = vsel %vm280, %v1319, 0
    %1423 = vmatprep.subr.mxu0 0.0
    %1424 = vmatpush1.msra.mxu0 %v1415
    %1425 = vmatprep.subr.mxu0 0.0
    %1426 = vmatpush1.msra.mxu0 %v1416
    %1427 = vmatprep.subr.mxu0 0.0
    %1428 = vmatpush1.msra.mxu0 %v1417
    %1429 = vmatprep.subr.mxu0 0.0
    %1430 = vmatpush1.msra.mxu0 %v1418
    %1431 = vmatprep.subr.mxu0 0.0
    %1432 = vmatpush1.msra.mxu0 0.0
    %1433 = vmatprep.subr.mxu0 0.0
    %1434 = vmatpush1.msra.mxu0 0.0
    %1435 = vmatprep.subr.mxu0 0.0
    %1436 = vmatpush1.msra.mxu0 0.0
    %1437 = vmatprep.subr.mxu0 0.0
    %1438 = vmatpush1.msra.mxu0 0.0
    %1439 = vmatprep.subr.mxu0 0.0
    %1440 = vmatpush1.msra.mxu0 0.0
    %1441 = vmatprep.subr.mxu0 0.0
    %1442 = vmatpush1.msra.mxu0 0.0
    %1443 = vmatprep.subr.mxu0 0.0
    %1444 = vmatpush1.msra.mxu0 0.0
    %1445 = vmatprep.subr.mxu0 0.0
    %1446 = vmatpush1.msra.mxu0 0.0
    %1447 = vmatprep.subr.mxu0 0.0
    %1448 = vmatpush1.msra.mxu0 0.0
    %1449 = vmatprep.subr.mxu0 0.0
    %1450 = vmatpush1.msra.mxu0 0.0
    %1451 = vmatprep.subr.mxu0 0.0
    %1452 = vmatpush1.msra.mxu0 0.0
    %1453 = vmatprep.subr.mxu0 0.0
    %1454 = vmatpush1.msra.mxu0 0.0
    %1455 = vmatprep.subr.mxu0 0.0
    %1456 = vmatpush1.msra.mxu0 0.0
    %1457 = vmatprep.subr.mxu0 0.0
    %1458 = vmatpush1.msra.mxu0 0.0
    %1459 = vmatprep.subr.mxu0 0.0
    %1460 = vmatpush1.msra.mxu0 0.0
    %1461 = vmatprep.subr.mxu0 0.0
    %1462 = vmatpush1.msra.mxu0 0.0
    %1463 = vmatprep.subr.mxu0 0.0
    %1464 = vmatpush1.msra.mxu0 0.0
    %1465 = vmatprep.subr.mxu0 0.0
    %1466 = vmatpush1.msra.mxu0 0.0
    %1467 = vmatprep.subr.mxu0 0.0
    %1468 = vmatpush1.msra.mxu0 0.0
    %1469 = vmatprep.subr.mxu0 0.0
    %1470 = vmatpush1.msra.mxu0 0.0
    %1471 = vmatprep.subr.mxu0 0.0
    %1472 = vmatpush1.msra.mxu0 0.0
    %1473 = vmatprep.subr.mxu0 0.0
    %1474 = vmatpush1.msra.mxu0 0.0
    %1475 = vmatprep.subr.mxu0 0.0
    %1476 = vmatpush1.msra.mxu0 0.0
    %1477 = vmatprep.subr.mxu0 0.0
    %1478 = vmatpush1.msra.mxu0 0.0
    %1479 = vmatprep.subr.mxu0 0.0
    %1480 = vmatpush1.msra.mxu0 0.0
    %1481 = vmatprep.subr.mxu0 0.0
    %1482 = vmatpush1.msra.mxu0 0.0
    %1483 = vmatprep.subr.mxu0 0.0
    %1484 = vmatpush1.msra.mxu0 0.0
    %1485 = vmatprep.subr.mxu0 0.0
    %1486 = vmatpush1.msra.mxu0 0.0
    %1487 = vmatprep.mubr.f32.mxu0 0.0
    %1488 = vmatmul.mubr.f32.gmra.mrb[0].mxu0 %v1419
    %v1489 = vpop.f32.mrb[0].mxu0
    %v1490 = vadd.f32 %v74, %v1489
    %v1491 = vpop.f32.mrb[0].mxu0
    %1492 = vmatprep.mubr.f32.mxu0 0.0
    %1493 = vmatmul.mubr.f32.gmra.mrb[0].mxu0 %v1421
    %v1494 = vpop.f32.mrb[0].mxu0
    %v1495 = vadd.f32 %v75, %v1494
    %v1496 = vpop.f32.mrb[0].mxu0
    %1497 = vdwg.mxu0
    %v1498 = vsel %vm111, %v1490, -inf
    %1499 = vmax.xlane.f32.xlu0 %v1498
    %v1500 = vpop.xlane.xlu0 %1499
    %v1501 = vsel %vm111, %v1495, -inf
    %1502 = vmax.xlane.f32.xlu0 %v1501
    %v1503 = vpop.xlane.xlu0 %1502
    %v1504 = vsub.f32 %v1490, %v1500
    %v1505 = vsub.f32 %v1495, %v1503
    %v1506 = vmul.f32 %v1504, 1.442695
    %v1507 = vpow.pop %v1506
    %v1508 = vmul.f32 %v1505, 1.442695
    %v1509 = vpow.pop %v1508
    %v1511 = vsel %vm111, %v1507, 0
    %v1514 = vsel %vm111, %v1509, 0
    %1516 = vmatprep.subr.mxu0 0.0
    %1517 = vmatpush1.msra.mxu0 %v76
    %1518 = vmatprep.subr.mxu0 0.0
    %1519 = vmatpush1.msra.mxu0 %v77
    %1520 = vmatprep.subr.mxu0 0.0
    %1521 = vmatpush1.msra.mxu0 %v78
    %1522 = vmatprep.subr.mxu0 0.0
    %1523 = vmatpush1.msra.mxu0 %v79
    %1524 = vmatprep.subr.mxu0 0.0
    %1525 = vmatpush1.msra.mxu0 %v80
    %1526 = vmatprep.subr.mxu0 0.0
    %1527 = vmatpush1.msra.mxu0 %v81
    %1528 = vmatprep.subr.mxu0 0.0
    %1529 = vmatpush1.msra.mxu0 %v82
    %1530 = vmatprep.subr.mxu0 0.0
    %1531 = vmatpush1.msra.mxu0 %v83
    %1532 = vmatprep.subr.mxu0 0.0
    %1533 = vmatpush1.msra.mxu0 0.0
    %1534 = vmatprep.subr.mxu0 0.0
    %1535 = vmatpush1.msra.mxu0 0.0
    %1536 = vmatprep.subr.mxu0 0.0
    %1537 = vmatpush1.msra.mxu0 0.0
    %1538 = vmatprep.subr.mxu0 0.0
    %1539 = vmatpush1.msra.mxu0 0.0
    %1540 = vmatprep.subr.mxu0 0.0
    %1541 = vmatpush1.msra.mxu0 0.0
    %1542 = vmatprep.subr.mxu0 0.0
    %1543 = vmatpush1.msra.mxu0 0.0
    %1544 = vmatprep.subr.mxu0 0.0
    %1545 = vmatpush1.msra.mxu0 0.0
    %1546 = vmatprep.subr.mxu0 0.0
    %1547 = vmatpush1.msra.mxu0 0.0
    %1548 = vmatprep.subr.mxu0 0.0
    %1549 = vmatpush1.msra.mxu0 0.0
    %1550 = vmatprep.subr.mxu0 0.0
    %1551 = vmatpush1.msra.mxu0 0.0
    %1552 = vmatprep.subr.mxu0 0.0
    %1553 = vmatpush1.msra.mxu0 0.0
    %1554 = vmatprep.subr.mxu0 0.0
    %1555 = vmatpush1.msra.mxu0 0.0
    %1556 = vmatprep.subr.mxu0 0.0
    %1557 = vmatpush1.msra.mxu0 0.0
    %1558 = vmatprep.subr.mxu0 0.0
    %1559 = vmatpush1.msra.mxu0 0.0
    %1560 = vmatprep.subr.mxu0 0.0
    %1561 = vmatpush1.msra.mxu0 0.0
    %1562 = vmatprep.subr.mxu0 0.0
    %1563 = vmatpush1.msra.mxu0 0.0
    %1564 = vmatprep.subr.mxu0 0.0
    %1565 = vmatpush1.msra.mxu0 0.0
    %1566 = vmatprep.subr.mxu0 0.0
    %1567 = vmatpush1.msra.mxu0 0.0
    %1568 = vmatprep.subr.mxu0 0.0
    %1569 = vmatpush1.msra.mxu0 0.0
    %1570 = vmatprep.subr.mxu0 0.0
    %1571 = vmatpush1.msra.mxu0 0.0
    %1572 = vmatprep.subr.mxu0 0.0
    %1573 = vmatpush1.msra.mxu0 0.0
    %1574 = vmatprep.subr.mxu0 0.0
    %1575 = vmatpush1.msra.mxu0 0.0
    %1576 = vmatprep.subr.mxu0 0.0
    %1577 = vmatpush1.msra.mxu0 0.0
    %1578 = vmatprep.subr.mxu0 0.0
    %1579 = vmatpush1.msra.mxu0 0.0
    %1580 = vmatprep.mubr.f32.mxu0 0.0
    %1581 = vmatmul.mubr.f32.gmra.mrb[0].mxu0 %v1511
    %v1582 = vpop.f32.mrb[0].mxu0
    %v1583 = vadd.f32 0.0, %v1582
    %v1584 = vpop.f32.mrb[0].mxu0
    %1585 = vmatprep.mubr.f32.mxu0 0.0
    %1586 = vmatmul.mubr.f32.gmra.mrb[0].mxu0 %v1514
    %v1587 = vpop.f32.mrb[0].mxu0
    %v1588 = vadd.f32 0.0, %v1587
    %v1589 = vpop.f32.mrb[0].mxu0
    %1590 = vdwg.mxu0
    %v1591 = vmax.f32 %v1583, 1e-30
    %v1592 = vmax.f32 %v1588, 1e-30
    %v1593 = vrcp.pop %v1591
    %v1594 = vrcp.pop %v1592
    %1595 = vrot.lane.b32.xlu0 %v1313, 64
    %v1596 = vpop.permute.xlu0 %1595
    %1597 = vrot.lane.b32.xlu0 %v1319, 64
    %v1598 = vpop.permute.xlu0 %1597
    %v1601 = vsel %vm275, %v1507, 0
    %v1603 = vsel %vm275, %v1509, 0
    %1605 = vmatprep.subr.mxu0 0.0
    %1606 = vmatpush1.msra.mxu0 %v1596
    %1607 = vmatprep.subr.mxu0 0.0
    %1608 = vmatpush1.msra.mxu0 %v1598
    %1609 = vmatprep.subr.mxu0 0.0
    %1610 = vmatpush1.msra.mxu0 0.0
    %1611 = vmatprep.subr.mxu0 0.0
    %1612 = vmatpush1.msra.mxu0 0.0
    %1613 = vmatprep.subr.mxu0 0.0
    %1614 = vmatpush1.msra.mxu0 0.0
    %1615 = vmatprep.subr.mxu0 0.0
    %1616 = vmatpush1.msra.mxu0 0.0
    %1617 = vmatprep.subr.mxu0 0.0
    %1618 = vmatpush1.msra.mxu0 0.0
    %1619 = vmatprep.subr.mxu0 0.0
    %1620 = vmatpush1.msra.mxu0 0.0
    %1621 = vmatprep.subr.mxu0 0.0
    %1622 = vmatpush1.msra.mxu0 0.0
    %1623 = vmatprep.subr.mxu0 0.0
    %1624 = vmatpush1.msra.mxu0 0.0
    %1625 = vmatprep.subr.mxu0 0.0
    %1626 = vmatpush1.msra.mxu0 0.0
    %1627 = vmatprep.subr.mxu0 0.0
    %1628 = vmatpush1.msra.mxu0 0.0
    %1629 = vmatprep.subr.mxu0 0.0
    %1630 = vmatpush1.msra.mxu0 0.0
    %1631 = vmatprep.subr.mxu0 0.0
    %1632 = vmatpush1.msra.mxu0 0.0
    %1633 = vmatprep.subr.mxu0 0.0
    %1634 = vmatpush1.msra.mxu0 0.0
    %1635 = vmatprep.subr.mxu0 0.0
    %1636 = vmatpush1.msra.mxu0 0.0
    %1637 = vmatprep.subr.mxu0 0.0
    %1638 = vmatpush1.msra.mxu0 0.0
    %1639 = vmatprep.subr.mxu0 0.0
    %1640 = vmatpush1.msra.mxu0 0.0
    %1641 = vmatprep.subr.mxu0 0.0
    %1642 = vmatpush1.msra.mxu0 0.0
    %1643 = vmatprep.subr.mxu0 0.0
    %1644 = vmatpush1.msra.mxu0 0.0
    %1645 = vmatprep.subr.mxu0 0.0
    %1646 = vmatpush1.msra.mxu0 0.0
    %1647 = vmatprep.subr.mxu0 0.0
    %1648 = vmatpush1.msra.mxu0 0.0
    %1649 = vmatprep.subr.mxu0 0.0
    %1650 = vmatpush1.msra.mxu0 0.0
    %1651 = vmatprep.subr.mxu0 0.0
    %1652 = vmatpush1.msra.mxu0 0.0
    %1653 = vmatprep.subr.mxu0 0.0
    %1654 = vmatpush1.msra.mxu0 0.0
    %1655 = vmatprep.subr.mxu0 0.0
    %1656 = vmatpush1.msra.mxu0 0.0
    %1657 = vmatprep.subr.mxu0 0.0
    %1658 = vmatpush1.msra.mxu0 0.0
    %1659 = vmatprep.subr.mxu0 0.0
    %1660 = vmatpush1.msra.mxu0 0.0
    %1661 = vmatprep.subr.mxu0 0.0
    %1662 = vmatpush1.msra.mxu0 0.0
    %1663 = vmatprep.subr.mxu0 0.0
    %1664 = vmatpush1.msra.mxu0 0.0
    %1665 = vmatprep.subr.mxu0 0.0
    %1666 = vmatpush1.msra.mxu0 0.0
    %1667 = vmatprep.subr.mxu0 0.0
    %1668 = vmatpush1.msra.mxu0 0.0
    %1669 = vmatprep.mubr.f32.mxu0 0.0
    %1670 = vmatmul.mubr.f32.gmra.mrb[0].mxu0 %v1601
    %v1671 = vpop.f32.mrb[0].mxu0
    %v1672 = vadd.f32 0.0, %v1671
    %v1673 = vpop.f32.mrb[0].mxu0
    %1674 = vmatprep.mubr.f32.mxu0 0.0
    %1675 = vmatmul.mubr.f32.gmra.mrb[0].mxu0 %v1603
    %v1676 = vpop.f32.mrb[0].mxu0
    %v1677 = vadd.f32 0.0, %v1676
    %v1678 = vpop.f32.mrb[0].mxu0
    %1679 = vdwg.mxu0
    %1681 = vset.pattern.permute.xlu0 0
    %1682 = vperm.xlu0 %1681, %v1593
    %v1683 = vpop.permute.xlu0 %1682
    %1686 = vset.pattern.permute.xlu0 0
    %1687 = vperm.xlu0 %1686, %v1594
    %v1688 = vpop.permute.xlu0 %1687
    %v1690 = vmul.f32 %v1672, %v1683
    %v1691 = vmul.f32 %v1677, %v1688
    %v1692 = vlaneseq
    %v1693 = vshrl.u32 %v1692, 7
    %v1694 = vsub.s32 1, %v1693
    %v1695 = vrot.slane %v1222, %v1694
    %v1696 = vadd.f32 %v1695, %v1690
    %v1697 = vadd.f32 %v1695, %v1691
    %1698 = vrot.lane.b32.xlu0 %v1507, 112
    %v1699 = vpop.permute.xlu0 %1698
    %1700 = vrot.lane.b32.xlu0 %v1509, 112
    %v1701 = vpop.permute.xlu0 %1700
    %1702 = vrot.lane.b32.xlu0 %v1313, 32
    %v1703 = vpop.permute.xlu0 %1702
    %1704 = vrot.lane.b32.xlu0 %v1319, 32
    %v1705 = vpop.permute.xlu0 %1704
    %v1708 = vsel %vm275, %v1699, 0
    %v1710 = vsel %vm275, %v1701, 0
    %1712 = vmatprep.subr.mxu0 0.0
    %1713 = vmatpush1.msra.mxu0 %v1703
    %1714 = vmatprep.subr.mxu0 0.0
    %1715 = vmatpush1.msra.mxu0 %v1705
    %1716 = vmatprep.subr.mxu0 0.0
    %1717 = vmatpush1.msra.mxu0 0.0
    %1718 = vmatprep.subr.mxu0 0.0
    %1719 = vmatpush1.msra.mxu0 0.0
    %1720 = vmatprep.subr.mxu0 0.0
    %1721 = vmatpush1.msra.mxu0 0.0
    %1722 = vmatprep.subr.mxu0 0.0
    %1723 = vmatpush1.msra.mxu0 0.0
    %1724 = vmatprep.subr.mxu0 0.0
    %1725 = vmatpush1.msra.mxu0 0.0
    %1726 = vmatprep.subr.mxu0 0.0
    %1727 = vmatpush1.msra.mxu0 0.0
    %1728 = vmatprep.subr.mxu0 0.0
    %1729 = vmatpush1.msra.mxu0 0.0
    %1730 = vmatprep.subr.mxu0 0.0
    %1731 = vmatpush1.msra.mxu0 0.0
    %1732 = vmatprep.subr.mxu0 0.0
    %1733 = vmatpush1.msra.mxu0 0.0
    %1734 = vmatprep.subr.mxu0 0.0
    %1735 = vmatpush1.msra.mxu0 0.0
    %1736 = vmatprep.subr.mxu0 0.0
    %1737 = vmatpush1.msra.mxu0 0.0
    %1738 = vmatprep.subr.mxu0 0.0
    %1739 = vmatpush1.msra.mxu0 0.0
    %1740 = vmatprep.subr.mxu0 0.0
    %1741 = vmatpush1.msra.mxu0 0.0
    %1742 = vmatprep.subr.mxu0 0.0
    %1743 = vmatpush1.msra.mxu0 0.0
    %1744 = vmatprep.subr.mxu0 0.0
    %1745 = vmatpush1.msra.mxu0 0.0
    %1746 = vmatprep.subr.mxu0 0.0
    %1747 = vmatpush1.msra.mxu0 0.0
    %1748 = vmatprep.subr.mxu0 0.0
    %1749 = vmatpush1.msra.mxu0 0.0
    %1750 = vmatprep.subr.mxu0 0.0
    %1751 = vmatpush1.msra.mxu0 0.0
    %1752 = vmatprep.subr.mxu0 0.0
    %1753 = vmatpush1.msra.mxu0 0.0
    %1754 = vmatprep.subr.mxu0 0.0
    %1755 = vmatpush1.msra.mxu0 0.0
    %1756 = vmatprep.subr.mxu0 0.0
    %1757 = vmatpush1.msra.mxu0 0.0
    %1758 = vmatprep.subr.mxu0 0.0
    %1759 = vmatpush1.msra.mxu0 0.0
    %1760 = vmatprep.subr.mxu0 0.0
    %1761 = vmatpush1.msra.mxu0 0.0
    %1762 = vmatprep.subr.mxu0 0.0
    %1763 = vmatpush1.msra.mxu0 0.0
    %1764 = vmatprep.subr.mxu0 0.0
    %1765 = vmatpush1.msra.mxu0 0.0
    %1766 = vmatprep.subr.mxu0 0.0
    %1767 = vmatpush1.msra.mxu0 0.0
    %1768 = vmatprep.subr.mxu0 0.0
    %1769 = vmatpush1.msra.mxu0 0.0
    %1770 = vmatprep.subr.mxu0 0.0
    %1771 = vmatpush1.msra.mxu0 0.0
    %1772 = vmatprep.subr.mxu0 0.0
    %1773 = vmatpush1.msra.mxu0 0.0
    %1774 = vmatprep.subr.mxu0 0.0
    %1775 = vmatpush1.msra.mxu0 0.0
    %1776 = vmatprep.mubr.f32.mxu0 0.0
    %1777 = vmatmul.mubr.f32.gmra.mrb[0].mxu0 %v1708
    %v1778 = vpop.f32.mrb[0].mxu0
    %v1779 = vadd.f32 0.0, %v1778
    %v1780 = vpop.f32.mrb[0].mxu0
    %1781 = vmatprep.mubr.f32.mxu0 0.0
    %1782 = vmatmul.mubr.f32.gmra.mrb[0].mxu0 %v1710
    %v1783 = vpop.f32.mrb[0].mxu0
    %v1784 = vadd.f32 0.0, %v1783
    %v1785 = vpop.f32.mrb[0].mxu0
    %1786 = vdwg.mxu0
    %1787 = vset.pattern.permute.xlu0 1
    %1788 = vperm.xlu0 %1787, %v1593
    %v1789 = vpop.permute.xlu0 %1788
    %1791 = vset.pattern.permute.xlu0 1
    %1792 = vperm.xlu0 %1791, %v1594
    %v1793 = vpop.permute.xlu0 %1792
    %v1795 = vmul.f32 %v1779, %v1789
    %v1796 = vmul.f32 %v1784, %v1793
    %v1797 = vadd.f32 %v1696, %v1795
    %v1798 = vadd.f32 %v1697, %v1796
    %1799 = vrot.lane.b32.xlu0 %v1507, 96
    %v1800 = vpop.permute.xlu0 %1799
    %1801 = vrot.lane.b32.xlu0 %v1509, 96
    %v1802 = vpop.permute.xlu0 %1801
    %v1803 = vsel %vm275, %v1800, 0
    %v1805 = vsel %vm275, %v1802, 0
    %1807 = vmatprep.subr.mxu0 0.0
    %1808 = vmatpush1.msra.mxu0 %v1315
    %1809 = vmatprep.subr.mxu0 0.0
    %1810 = vmatpush1.msra.mxu0 %v1321
    %1811 = vmatprep.subr.mxu0 0.0
    %1812 = vmatpush1.msra.mxu0 0.0
    %1813 = vmatprep.subr.mxu0 0.0
    %1814 = vmatpush1.msra.mxu0 0.0
    %1815 = vmatprep.subr.mxu0 0.0
    %1816 = vmatpush1.msra.mxu0 0.0
    %1817 = vmatprep.subr.mxu0 0.0
    %1818 = vmatpush1.msra.mxu0 0.0
    %1819 = vmatprep.subr.mxu0 0.0
    %1820 = vmatpush1.msra.mxu0 0.0
    %1821 = vmatprep.subr.mxu0 0.0
    %1822 = vmatpush1.msra.mxu0 0.0
    %1823 = vmatprep.subr.mxu0 0.0
    %1824 = vmatpush1.msra.mxu0 0.0
    %1825 = vmatprep.subr.mxu0 0.0
    %1826 = vmatpush1.msra.mxu0 0.0
    %1827 = vmatprep.subr.mxu0 0.0
    %1828 = vmatpush1.msra.mxu0 0.0
    %1829 = vmatprep.subr.mxu0 0.0
    %1830 = vmatpush1.msra.mxu0 0.0
    %1831 = vmatprep.subr.mxu0 0.0
    %1832 = vmatpush1.msra.mxu0 0.0
    %1833 = vmatprep.subr.mxu0 0.0
    %1834 = vmatpush1.msra.mxu0 0.0
    %1835 = vmatprep.subr.mxu0 0.0
    %1836 = vmatpush1.msra.mxu0 0.0
    %1837 = vmatprep.subr.mxu0 0.0
    %1838 = vmatpush1.msra.mxu0 0.0
    %1839 = vmatprep.subr.mxu0 0.0
    %1840 = vmatpush1.msra.mxu0 0.0
    %1841 = vmatprep.subr.mxu0 0.0
    %1842 = vmatpush1.msra.mxu0 0.0
    %1843 = vmatprep.subr.mxu0 0.0
    %1844 = vmatpush1.msra.mxu0 0.0
    %1845 = vmatprep.subr.mxu0 0.0
    %1846 = vmatpush1.msra.mxu0 0.0
    %1847 = vmatprep.subr.mxu0 0.0
    %1848 = vmatpush1.msra.mxu0 0.0
    %1849 = vmatprep.subr.mxu0 0.0
    %1850 = vmatpush1.msra.mxu0 0.0
    %1851 = vmatprep.subr.mxu0 0.0
    %1852 = vmatpush1.msra.mxu0 0.0
    %1853 = vmatprep.subr.mxu0 0.0
    %1854 = vmatpush1.msra.mxu0 0.0
    %1855 = vmatprep.subr.mxu0 0.0
    %1856 = vmatpush1.msra.mxu0 0.0
    %1857 = vmatprep.subr.mxu0 0.0
    %1858 = vmatpush1.msra.mxu0 0.0
    %1859 = vmatprep.subr.mxu0 0.0
    %1860 = vmatpush1.msra.mxu0 0.0
    %1861 = vmatprep.subr.mxu0 0.0
    %1862 = vmatpush1.msra.mxu0 0.0
    %1863 = vmatprep.subr.mxu0 0.0
    %1864 = vmatpush1.msra.mxu0 0.0
    %1865 = vmatprep.subr.mxu0 0.0
    %1866 = vmatpush1.msra.mxu0 0.0
    %1867 = vmatprep.subr.mxu0 0.0
    %1868 = vmatpush1.msra.mxu0 0.0
    %1869 = vmatprep.subr.mxu0 0.0
    %1870 = vmatpush1.msra.mxu0 0.0
    %1871 = vmatprep.mubr.f32.mxu0 0.0
    %1872 = vmatmul.mubr.f32.gmra.mrb[0].mxu0 %v1803
    %v1873 = vpop.f32.mrb[0].mxu0
    %v1874 = vadd.f32 0.0, %v1873
    %v1875 = vpop.f32.mrb[0].mxu0
    %1876 = vmatprep.mubr.f32.mxu0 0.0
    %1877 = vmatmul.mubr.f32.gmra.mrb[0].mxu0 %v1805
    %v1878 = vpop.f32.mrb[0].mxu0
    %v1879 = vadd.f32 0.0, %v1878
    %v1880 = vpop.f32.mrb[0].mxu0
    %1881 = vdwg.mxu0
    %1882 = vset.pattern.permute.xlu0 2
    %1883 = vperm.xlu0 %1882, %v1593
    %v1884 = vpop.permute.xlu0 %1883
    %1886 = vset.pattern.permute.xlu0 2
    %1887 = vperm.xlu0 %1886, %v1594
    %v1888 = vpop.permute.xlu0 %1887
    %v1890 = vmul.f32 %v1874, %v1884
    %v1891 = vmul.f32 %v1879, %v1888
    %v1892 = vadd.f32 %v1797, %v1890
    %v1893 = vadd.f32 %v1798, %v1891
    %1894 = vrot.lane.b32.xlu0 %v1507, 80
    %v1895 = vpop.permute.xlu0 %1894
    %1896 = vrot.lane.b32.xlu0 %v1509, 80
    %v1897 = vpop.permute.xlu0 %1896
    %1900 = vrot.lane.b32.xlu0 %v1315, 96
    %v1901 = vpop.permute.xlu0 %1900
    %1902 = vrot.lane.b32.xlu0 %v1321, 96
    %v1903 = vpop.permute.xlu0 %1902
    %v1906 = vsel %vm275, %v1895, 0
    %v1908 = vsel %vm275, %v1897, 0
    %1910 = vmatprep.subr.mxu0 0.0
    %1911 = vmatpush1.msra.mxu0 %v1901
    %1912 = vmatprep.subr.mxu0 0.0
    %1913 = vmatpush1.msra.mxu0 %v1903
    %1914 = vmatprep.subr.mxu0 0.0
    %1915 = vmatpush1.msra.mxu0 0.0
    %1916 = vmatprep.subr.mxu0 0.0
    %1917 = vmatpush1.msra.mxu0 0.0
    %1918 = vmatprep.subr.mxu0 0.0
    %1919 = vmatpush1.msra.mxu0 0.0
    %1920 = vmatprep.subr.mxu0 0.0
    %1921 = vmatpush1.msra.mxu0 0.0
    %1922 = vmatprep.subr.mxu0 0.0
    %1923 = vmatpush1.msra.mxu0 0.0
    %1924 = vmatprep.subr.mxu0 0.0
    %1925 = vmatpush1.msra.mxu0 0.0
    %1926 = vmatprep.subr.mxu0 0.0
    %1927 = vmatpush1.msra.mxu0 0.0
    %1928 = vmatprep.subr.mxu0 0.0
    %1929 = vmatpush1.msra.mxu0 0.0
    %1930 = vmatprep.subr.mxu0 0.0
    %1931 = vmatpush1.msra.mxu0 0.0
    %1932 = vmatprep.subr.mxu0 0.0
    %1933 = vmatpush1.msra.mxu0 0.0
    %1934 = vmatprep.subr.mxu0 0.0
    %1935 = vmatpush1.msra.mxu0 0.0
    %1936 = vmatprep.subr.mxu0 0.0
    %1937 = vmatpush1.msra.mxu0 0.0
    %1938 = vmatprep.subr.mxu0 0.0
    %1939 = vmatpush1.msra.mxu0 0.0
    %1940 = vmatprep.subr.mxu0 0.0
    %1941 = vmatpush1.msra.mxu0 0.0
    %1942 = vmatprep.subr.mxu0 0.0
    %1943 = vmatpush1.msra.mxu0 0.0
    %1944 = vmatprep.subr.mxu0 0.0
    %1945 = vmatpush1.msra.mxu0 0.0
    %1946 = vmatprep.subr.mxu0 0.0
    %1947 = vmatpush1.msra.mxu0 0.0
    %1948 = vmatprep.subr.mxu0 0.0
    %1949 = vmatpush1.msra.mxu0 0.0
    %1950 = vmatprep.subr.mxu0 0.0
    %1951 = vmatpush1.msra.mxu0 0.0
    %1952 = vmatprep.subr.mxu0 0.0
    %1953 = vmatpush1.msra.mxu0 0.0
    %1954 = vmatprep.subr.mxu0 0.0
    %1955 = vmatpush1.msra.mxu0 0.0
    %1956 = vmatprep.subr.mxu0 0.0
    %1957 = vmatpush1.msra.mxu0 0.0
    %1958 = vmatprep.subr.mxu0 0.0
    %1959 = vmatpush1.msra.mxu0 0.0
    %1960 = vmatprep.subr.mxu0 0.0
    %1961 = vmatpush1.msra.mxu0 0.0
    %1962 = vmatprep.subr.mxu0 0.0
    %1963 = vmatpush1.msra.mxu0 0.0
    %1964 = vmatprep.subr.mxu0 0.0
    %1965 = vmatpush1.msra.mxu0 0.0
    %1966 = vmatprep.subr.mxu0 0.0
    %1967 = vmatpush1.msra.mxu0 0.0
    %1968 = vmatprep.subr.mxu0 0.0
    %1969 = vmatpush1.msra.mxu0 0.0
    %1970 = vmatprep.subr.mxu0 0.0
    %1971 = vmatpush1.msra.mxu0 0.0
    %1972 = vmatprep.subr.mxu0 0.0
    %1973 = vmatpush1.msra.mxu0 0.0
    %1974 = vmatprep.mubr.f32.mxu0 0.0
    %1975 = vmatmul.mubr.f32.gmra.mrb[0].mxu0 %v1906
    %v1976 = vpop.f32.mrb[0].mxu0
    %v1977 = vadd.f32 0.0, %v1976
    %v1978 = vpop.f32.mrb[0].mxu0
    %1979 = vmatprep.mubr.f32.mxu0 0.0
    %1980 = vmatmul.mubr.f32.gmra.mrb[0].mxu0 %v1908
    %v1981 = vpop.f32.mrb[0].mxu0
    %v1982 = vadd.f32 0.0, %v1981
    %v1983 = vpop.f32.mrb[0].mxu0
    %1984 = vdwg.mxu0
    %1985 = vset.pattern.permute.xlu0 3
    %1986 = vperm.xlu0 %1985, %v1593
    %v1987 = vpop.permute.xlu0 %1986
    %1989 = vset.pattern.permute.xlu0 3
    %1990 = vperm.xlu0 %1989, %v1594
    %v1991 = vpop.permute.xlu0 %1990
    %v1993 = vmul.f32 %v1977, %v1987
    %v1994 = vmul.f32 %v1982, %v1991
    %v1995 = vadd.f32 %v1892, %v1993
    %v1996 = vadd.f32 %v1893, %v1994
    %v1997 = vadd.f32 %v1219, %v1995
    %v1998 = vadd.f32 %v1220, %v1996
    %v1999 = vsel %vm280, %v1997, 0.0
    %2000 = vadd.xlane.f32.xlu0 %v1999
    %v2001 = vpop.xlane.xlu0 %2000
    %v2002 = vsel %vm280, %v1998, 0.0
    %2003 = vadd.xlane.f32.xlu0 %v2002
    %v2004 = vpop.xlane.xlu0 %2003
    %v2005 = vmul.f32 %v1997, %v1997
    %v2006 = vmul.f32 %v1998, %v1998
    %v2007 = vsel %vm280, %v2005, 0.0
    %2008 = vadd.xlane.f32.xlu0 %v2007
    %v2009 = vpop.xlane.xlu0 %2008
    %v2010 = vsel %vm280, %v2006, 0.0
    %2011 = vadd.xlane.f32.xlu0 %v2010
    %v2012 = vpop.xlane.xlu0 %2011
    %v2013 = vmul.f32 %v2001, 0.03125
    %v2014 = vmul.f32 %v2004, 0.03125
    %v2015 = vmul.f32 %v2009, 0.03125
    %v2016 = vmul.f32 %v2012, 0.03125
    %v2017 = vmul.f32 %v2013, %v2013
    %v2018 = vmul.f32 %v2014, %v2014
    %v2019 = vsub.f32 %v2015, %v2017
    %v2020 = vsub.f32 %v2016, %v2018
    %v2021 = vmax.f32 %v2019, 0.0
    %v2022 = vmax.f32 %v2020, 0.0
    %v2023 = vsub.f32 %v1997, %v2013
    %v2024 = vsub.f32 %v1998, %v2014
    %v2025 = vadd.f32 %v2021, 1e-05
    %v2026 = vadd.f32 %v2022, 1e-05
    %v2027 = vrsqrt.pop %v2025
    %v2028 = vrsqrt.pop %v2026
    %v2029 = vmul.f32 %v2023, %v2027
    %v2030 = vmul.f32 %v2024, %v2028
    %v2031 = vlaneseq
    %v2032 = vshrl.u32 %v2031, 7
    %v2033 = vsub.s32 2, %v2032
    %v2034 = vrot.slane %v1222, %v2033
    %v2035 = vmul.f32 %v2029, %v2034
    %v2036 = vmul.f32 %v2030, %v2034
    %v2037 = vlaneseq
    %v2038 = vshrl.u32 %v2037, 7
    %v2039 = vsub.s32 3, %v2038
    %v2040 = vrot.slane %v1222, %v2039
    %v2041 = vadd.f32 %v2035, %v2040
    %v2042 = vadd.f32 %v2036, %v2040
    %v2043 = vld [vmem:[%s1221 + $0xc0] sm:$0xff]
    %v2044 = vld [vmem:[%s1221 + $0xd0] sm:$0xff]
    %v2045 = vld [vmem:[%s1221 + $0xe0] sm:$0xff]
    %v2046 = vld [vmem:[%s1221 + $0xf0] sm:$0xff]
    %v2047 = vld [vmem:[%s1221 + $0x40] sm:$0xff]
    %v2048 = vld [vmem:[%s1221 + $0x50] sm:$0xff]
    %v2049 = vld [vmem:[%s1221 + $0x60] sm:$0xff]
    %v2050 = vld [vmem:[%s1221 + $0x70] sm:$0xff]
    %v2051 = vld [vmem:[%s1221 + $0x80] sm:$0xff]
    %v2052 = vld [vmem:[%s1221 + $0x90] sm:$0xff]
    %v2053 = vld [vmem:[%s1221 + $0xa0] sm:$0xff]
    %v2054 = vld [vmem:[%s1221 + $0xb0] sm:$0xff]
    %v2055 = vlaneseq
    %v2056 = vshrl.u32 %v2055, 7
    %v2057 = vsub.s32 4, %v2056
    %v2058 = vrot.slane %v1222, %v2057
    %v2060 = vsel %vm280, %v2041, 0
    %v2063 = vsel %vm280, %v2042, 0
    %2065 = vmatprep.subr.mxu0 0.0
    %2066 = vmatpush1.msra.mxu0 %v2043
    %2067 = vmatprep.subr.mxu0 0.0
    %2068 = vmatpush1.msra.mxu0 %v2044
    %2069 = vmatprep.subr.mxu0 0.0
    %2070 = vmatpush1.msra.mxu0 %v2045
    %2071 = vmatprep.subr.mxu0 0.0
    %2072 = vmatpush1.msra.mxu0 %v2046
    %2073 = vmatprep.subr.mxu0 0.0
    %2074 = vmatpush1.msra.mxu0 0.0
    %2075 = vmatprep.subr.mxu0 0.0
    %2076 = vmatpush1.msra.mxu0 0.0
    %2077 = vmatprep.subr.mxu0 0.0
    %2078 = vmatpush1.msra.mxu0 0.0
    %2079 = vmatprep.subr.mxu0 0.0
    %2080 = vmatpush1.msra.mxu0 0.0
    %2081 = vmatprep.subr.mxu0 0.0
    %2082 = vmatpush1.msra.mxu0 0.0
    %2083 = vmatprep.subr.mxu0 0.0
    %2084 = vmatpush1.msra.mxu0 0.0
    %2085 = vmatprep.subr.mxu0 0.0
    %2086 = vmatpush1.msra.mxu0 0.0
    %2087 = vmatprep.subr.mxu0 0.0
    %2088 = vmatpush1.msra.mxu0 0.0
    %2089 = vmatprep.subr.mxu0 0.0
    %2090 = vmatpush1.msra.mxu0 0.0
    %2091 = vmatprep.subr.mxu0 0.0
    %2092 = vmatpush1.msra.mxu0 0.0
    %2093 = vmatprep.subr.mxu0 0.0
    %2094 = vmatpush1.msra.mxu0 0.0
    %2095 = vmatprep.subr.mxu0 0.0
    %2096 = vmatpush1.msra.mxu0 0.0
    %2097 = vmatprep.subr.mxu0 0.0
    %2098 = vmatpush1.msra.mxu0 0.0
    %2099 = vmatprep.subr.mxu0 0.0
    %2100 = vmatpush1.msra.mxu0 0.0
    %2101 = vmatprep.subr.mxu0 0.0
    %2102 = vmatpush1.msra.mxu0 0.0
    %2103 = vmatprep.subr.mxu0 0.0
    %2104 = vmatpush1.msra.mxu0 0.0
    %2105 = vmatprep.subr.mxu0 0.0
    %2106 = vmatpush1.msra.mxu0 0.0
    %2107 = vmatprep.subr.mxu0 0.0
    %2108 = vmatpush1.msra.mxu0 0.0
    %2109 = vmatprep.subr.mxu0 0.0
    %2110 = vmatpush1.msra.mxu0 0.0
    %2111 = vmatprep.subr.mxu0 0.0
    %2112 = vmatpush1.msra.mxu0 0.0
    %2113 = vmatprep.subr.mxu0 0.0
    %2114 = vmatpush1.msra.mxu0 0.0
    %2115 = vmatprep.subr.mxu0 0.0
    %2116 = vmatpush1.msra.mxu0 0.0
    %2117 = vmatprep.subr.mxu0 0.0
    %2118 = vmatpush1.msra.mxu0 0.0
    %2119 = vmatprep.subr.mxu0 0.0
    %2120 = vmatpush1.msra.mxu0 0.0
    %2121 = vmatprep.subr.mxu0 0.0
    %2122 = vmatpush1.msra.mxu0 0.0
    %2123 = vmatprep.subr.mxu0 0.0
    %2124 = vmatpush1.msra.mxu0 0.0
    %2125 = vmatprep.subr.mxu0 0.0
    %2126 = vmatpush1.msra.mxu0 0.0
    %2127 = vmatprep.subr.mxu0 0.0
    %2128 = vmatpush1.msra.mxu0 0.0
    %2129 = vmatprep.mubr.f32.mxu0 0.0
    %2130 = vmatmul.mubr.f32.gmra.mrb[0].mxu0 %v2060
    %v2131 = vpop.f32.mrb[0].mxu0
    %v2132 = vadd.f32 %v2058, %v2131
    %v2133 = vpop.f32.mrb[0].mxu0
    %2134 = vmatprep.mubr.f32.mxu0 0.0
    %2135 = vmatmul.mubr.f32.gmra.mrb[0].mxu0 %v2063
    %v2136 = vpop.f32.mrb[0].mxu0
    %v2137 = vadd.f32 %v2058, %v2136
    %v2138 = vpop.f32.mrb[0].mxu0
    %2139 = vdwg.mxu0
    %v2140 = vmax.f32 %v2132, 0.0
    %v2141 = vmax.f32 %v2137, 0.0
    %v2142 = vlaneseq
    %v2143 = vshrl.u32 %v2142, 7
    %v2144 = vsub.s32 5, %v2143
    %v2145 = vrot.slane %v1222, %v2144
    %v2147 = vsel %vm111, %v2140, 0
    %v2150 = vsel %vm111, %v2141, 0
    %2152 = vmatprep.subr.mxu0 0.0
    %2153 = vmatpush1.msra.mxu0 %v2047
    %2154 = vmatprep.subr.mxu0 0.0
    %2155 = vmatpush1.msra.mxu0 %v2048
    %2156 = vmatprep.subr.mxu0 0.0
    %2157 = vmatpush1.msra.mxu0 %v2049
    %2158 = vmatprep.subr.mxu0 0.0
    %2159 = vmatpush1.msra.mxu0 %v2050
    %2160 = vmatprep.subr.mxu0 0.0
    %2161 = vmatpush1.msra.mxu0 %v2051
    %2162 = vmatprep.subr.mxu0 0.0
    %2163 = vmatpush1.msra.mxu0 %v2052
    %2164 = vmatprep.subr.mxu0 0.0
    %2165 = vmatpush1.msra.mxu0 %v2053
    %2166 = vmatprep.subr.mxu0 0.0
    %2167 = vmatpush1.msra.mxu0 %v2054
    %2168 = vmatprep.subr.mxu0 0.0
    %2169 = vmatpush1.msra.mxu0 0.0
    %2170 = vmatprep.subr.mxu0 0.0
    %2171 = vmatpush1.msra.mxu0 0.0
    %2172 = vmatprep.subr.mxu0 0.0
    %2173 = vmatpush1.msra.mxu0 0.0
    %2174 = vmatprep.subr.mxu0 0.0
    %2175 = vmatpush1.msra.mxu0 0.0
    %2176 = vmatprep.subr.mxu0 0.0
    %2177 = vmatpush1.msra.mxu0 0.0
    %2178 = vmatprep.subr.mxu0 0.0
    %2179 = vmatpush1.msra.mxu0 0.0
    %2180 = vmatprep.subr.mxu0 0.0
    %2181 = vmatpush1.msra.mxu0 0.0
    %2182 = vmatprep.subr.mxu0 0.0
    %2183 = vmatpush1.msra.mxu0 0.0
    %2184 = vmatprep.subr.mxu0 0.0
    %2185 = vmatpush1.msra.mxu0 0.0
    %2186 = vmatprep.subr.mxu0 0.0
    %2187 = vmatpush1.msra.mxu0 0.0
    %2188 = vmatprep.subr.mxu0 0.0
    %2189 = vmatpush1.msra.mxu0 0.0
    %2190 = vmatprep.subr.mxu0 0.0
    %2191 = vmatpush1.msra.mxu0 0.0
    %2192 = vmatprep.subr.mxu0 0.0
    %2193 = vmatpush1.msra.mxu0 0.0
    %2194 = vmatprep.subr.mxu0 0.0
    %2195 = vmatpush1.msra.mxu0 0.0
    %2196 = vmatprep.subr.mxu0 0.0
    %2197 = vmatpush1.msra.mxu0 0.0
    %2198 = vmatprep.subr.mxu0 0.0
    %2199 = vmatpush1.msra.mxu0 0.0
    %2200 = vmatprep.subr.mxu0 0.0
    %2201 = vmatpush1.msra.mxu0 0.0
    %2202 = vmatprep.subr.mxu0 0.0
    %2203 = vmatpush1.msra.mxu0 0.0
    %2204 = vmatprep.subr.mxu0 0.0
    %2205 = vmatpush1.msra.mxu0 0.0
    %2206 = vmatprep.subr.mxu0 0.0
    %2207 = vmatpush1.msra.mxu0 0.0
    %2208 = vmatprep.subr.mxu0 0.0
    %2209 = vmatpush1.msra.mxu0 0.0
    %2210 = vmatprep.subr.mxu0 0.0
    %2211 = vmatpush1.msra.mxu0 0.0
    %2212 = vmatprep.subr.mxu0 0.0
    %2213 = vmatpush1.msra.mxu0 0.0
    %2214 = vmatprep.subr.mxu0 0.0
    %2215 = vmatpush1.msra.mxu0 0.0
    %2216 = vmatprep.mubr.f32.mxu0 0.0
    %2217 = vmatmul.mubr.f32.gmra.mrb[0].mxu0 %v2147
    %v2218 = vpop.f32.mrb[0].mxu0
    %v2219 = vadd.f32 %v2145, %v2218
    %v2220 = vpop.f32.mrb[0].mxu0
    %2221 = vmatprep.mubr.f32.mxu0 0.0
    %2222 = vmatmul.mubr.f32.gmra.mrb[0].mxu0 %v2150
    %v2223 = vpop.f32.mrb[0].mxu0
    %v2224 = vadd.f32 %v2145, %v2223
    %v2225 = vpop.f32.mrb[0].mxu0
    %2226 = vdwg.mxu0
    %v2227 = vadd.f32 %v2041, %v2219
    %v2228 = vadd.f32 %v2042, %v2224
    %v2229 = vsel %vm280, %v2227, 0.0
    %2230 = vadd.xlane.f32.xlu0 %v2229
    %v2231 = vpop.xlane.xlu0 %2230
    %v2232 = vsel %vm280, %v2228, 0.0
    %2233 = vadd.xlane.f32.xlu0 %v2232
    %v2234 = vpop.xlane.xlu0 %2233
    %v2235 = vmul.f32 %v2227, %v2227
    %v2236 = vmul.f32 %v2228, %v2228
    %v2237 = vsel %vm280, %v2235, 0.0
    %2238 = vadd.xlane.f32.xlu0 %v2237
    %v2239 = vpop.xlane.xlu0 %2238
    %v2240 = vsel %vm280, %v2236, 0.0
    %2241 = vadd.xlane.f32.xlu0 %v2240
    %v2242 = vpop.xlane.xlu0 %2241
    %v2243 = vmul.f32 %v2231, 0.03125
    %v2244 = vmul.f32 %v2234, 0.03125
    %v2245 = vmul.f32 %v2239, 0.03125
    %v2246 = vmul.f32 %v2242, 0.03125
    %v2247 = vmul.f32 %v2243, %v2243
    %v2248 = vmul.f32 %v2244, %v2244
    %v2249 = vsub.f32 %v2245, %v2247
    %v2250 = vsub.f32 %v2246, %v2248
    %v2251 = vmax.f32 %v2249, 0.0
    %v2252 = vmax.f32 %v2250, 0.0
    %v2253 = vsub.f32 %v2227, %v2243
    %v2254 = vsub.f32 %v2228, %v2244
    %v2255 = vadd.f32 %v2251, 1e-05
    %v2256 = vadd.f32 %v2252, 1e-05
    %v2257 = vrsqrt.pop %v2255
    %v2258 = vrsqrt.pop %v2256
    %v2259 = vmul.f32 %v2253, %v2257
    %v2260 = vmul.f32 %v2254, %v2258
    %v2261 = vlaneseq
    %v2262 = vshrl.u32 %v2261, 7
    %v2263 = vsub.s32 6, %v2262
    %v2264 = vrot.slane %v1222, %v2263
    %v2265 = vmul.f32 %v2259, %v2264
    %v2266 = vmul.f32 %v2260, %v2264
    %v2267 = vlaneseq
    %v2268 = vshrl.u32 %v2267, 7
    %v2269 = vsub.s32 7, %v2268
    %v2270 = vrot.slane %v1222, %v2269
    %v2271 = vadd.f32 %v2265, %v2270
    %v2272 = vadd.f32 %v2266, %v2270
    %v2274 = vsel %vm280, %v2271, 0
    %v2277 = vsel %vm280, %v2272, 0
    %2279 = vmatprep.subr.mxu0 0.0
    %2280 = vmatpush1.msra.mxu0 %v66
    %2281 = vmatprep.subr.mxu0 0.0
    %2282 = vmatpush1.msra.mxu0 %v67
    %2283 = vmatprep.subr.mxu0 0.0
    %2284 = vmatpush1.msra.mxu0 %v68
    %2285 = vmatprep.subr.mxu0 0.0
    %2286 = vmatpush1.msra.mxu0 %v69
    %2287 = vmatprep.subr.mxu0 0.0
    %2288 = vmatpush1.msra.mxu0 0.0
    %2289 = vmatprep.subr.mxu0 0.0
    %2290 = vmatpush1.msra.mxu0 0.0
    %2291 = vmatprep.subr.mxu0 0.0
    %2292 = vmatpush1.msra.mxu0 0.0
    %2293 = vmatprep.subr.mxu0 0.0
    %2294 = vmatpush1.msra.mxu0 0.0
    %2295 = vmatprep.subr.mxu0 0.0
    %2296 = vmatpush1.msra.mxu0 0.0
    %2297 = vmatprep.subr.mxu0 0.0
    %2298 = vmatpush1.msra.mxu0 0.0
    %2299 = vmatprep.subr.mxu0 0.0
    %2300 = vmatpush1.msra.mxu0 0.0
    %2301 = vmatprep.subr.mxu0 0.0
    %2302 = vmatpush1.msra.mxu0 0.0
    %2303 = vmatprep.subr.mxu0 0.0
    %2304 = vmatpush1.msra.mxu0 0.0
    %2305 = vmatprep.subr.mxu0 0.0
    %2306 = vmatpush1.msra.mxu0 0.0
    %2307 = vmatprep.subr.mxu0 0.0
    %2308 = vmatpush1.msra.mxu0 0.0
    %2309 = vmatprep.subr.mxu0 0.0
    %2310 = vmatpush1.msra.mxu0 0.0
    %2311 = vmatprep.subr.mxu0 0.0
    %2312 = vmatpush1.msra.mxu0 0.0
    %2313 = vmatprep.subr.mxu0 0.0
    %2314 = vmatpush1.msra.mxu0 0.0
    %2315 = vmatprep.subr.mxu0 0.0
    %2316 = vmatpush1.msra.mxu0 0.0
    %2317 = vmatprep.subr.mxu0 0.0
    %2318 = vmatpush1.msra.mxu0 0.0
    %2319 = vmatprep.subr.mxu0 0.0
    %2320 = vmatpush1.msra.mxu0 0.0
    %2321 = vmatprep.subr.mxu0 0.0
    %2322 = vmatpush1.msra.mxu0 0.0
    %2323 = vmatprep.subr.mxu0 0.0
    %2324 = vmatpush1.msra.mxu0 0.0
    %2325 = vmatprep.subr.mxu0 0.0
    %2326 = vmatpush1.msra.mxu0 0.0
    %2327 = vmatprep.subr.mxu0 0.0
    %2328 = vmatpush1.msra.mxu0 0.0
    %2329 = vmatprep.subr.mxu0 0.0
    %2330 = vmatpush1.msra.mxu0 0.0
    %2331 = vmatprep.subr.mxu0 0.0
    %2332 = vmatpush1.msra.mxu0 0.0
    %2333 = vmatprep.subr.mxu0 0.0
    %2334 = vmatpush1.msra.mxu0 0.0
    %2335 = vmatprep.subr.mxu0 0.0
    %2336 = vmatpush1.msra.mxu0 0.0
    %2337 = vmatprep.subr.mxu0 0.0
    %2338 = vmatpush1.msra.mxu0 0.0
    %2339 = vmatprep.subr.mxu0 0.0
    %2340 = vmatpush1.msra.mxu0 0.0
    %2341 = vmatprep.subr.mxu0 0.0
    %2342 = vmatpush1.msra.mxu0 0.0
    %2343 = vmatprep.mubr.f32.mxu0 0.0
    %2344 = vmatmul.mubr.f32.gmra.mrb[0].mxu0 %v2274
    %v2345 = vpop.f32.mrb[0].mxu0
    %v2346 = vadd.f32 %v84, %v2345
    %v2347 = vpop.f32.mrb[0].mxu0
    %2348 = vmatprep.mubr.f32.mxu0 0.0
    %2349 = vmatmul.mubr.f32.gmra.mrb[0].mxu0 %v2277
    %v2350 = vpop.f32.mrb[0].mxu0
    %v2351 = vadd.f32 %v84, %v2350
    %v2352 = vpop.f32.mrb[0].mxu0
    %2353 = vdwg.mxu0
    %2354 = vst [vmem:[%s3] sm:$0xff] %v2346
    %2355 = vst [vmem:[%s3 + $0x8] sm:$0xff] %v2351
    // Predicated region
    $region22: #{forward.1} parent=1 // pred_check
      _
    $region23: #{forward.1} parent=1 // pred_check_branch
      %2357 = sbr.rel (0) target = $region25
    $region24: #{forward.1} parent=1 // pred_region
      _
    $region25: #{forward.1} parent=1 // pred_fallthru
      _
    // Predicated region
    $region26: #{forward.1} parent=1 // pred_check
      _
    $region27: #{forward.1} parent=1 // pred_check_branch
      %2359 = sbr.rel (0) target = $region29
    $region28: #{forward.1} parent=1 // pred_region
      _
    $region29: #{forward.1} parent=1 // pred_fallthru
      _
    %2360 = vsyncpa [#allocation3], 1
    %2361 = vsyncpa [#allocation5], 1

</llo_original>
